<compile_context>
chip_gen: v7x
topology: tpu7x:2x2x1
jax: 0.10.0
libtpu: 0.0.40
codegen_flags: <defaults>
</compile_context>

<pallas_src>
import functools

import numpy as np
import jax
import jax.numpy as jnp
from jax.experimental import pallas as pl
from jax.experimental.pallas import tpu as pltpu

KSIZE = 7
PAD = 3
BN_EPS = 1e-5


# --------------------------- shared depthwise-conv body ---------------------------
def _dwconv(x, wm_ref, bias, H, W):
    """x: (C, HW) f32; wm_ref: (49, C, HW) weight*mask ref; bias: (C, 1). Returns conv+bias."""
    HW = H * W
    acc = jnp.zeros(x.shape, jnp.float32)
    for kh in range(KSIZE):
        for kw in range(KSIZE):
            tap = kh * KSIZE + kw
            # out[l] needs x[l + (kh-PAD)*W + (kw-PAD)] -> circular lane roll; the zero padding is
            # already folded into wm (masked taps are exactly 0), so one vmul + one vadd per tap.
            shift = ((PAD - kh) * W + (PAD - kw)) % HW
            xs = pltpu.roll(x, shift, axis=1) if shift else x
            acc = acc + xs * wm_ref[tap]
    return acc + bias


# --------------------------- fused single-kernel path ---------------------------
def _fused_kernel(wm_ref, bias_ref, gamma_ref, beta_ref, x_ref, o_ref,
                  conv_buf, sum_buf, ssq_buf, *, H, W, count):
    """grid = (2, N): phase 0 = conv + stats into VMEM, phase 1 = BN + ReLU + residual."""
    p = pl.program_id(0)
    n = pl.program_id(1)

    @pl.when(p == 0)
    def _phase_conv():
        @pl.when(n == 0)
        def _init():
            sum_buf[...] = jnp.zeros_like(sum_buf)
            ssq_buf[...] = jnp.zeros_like(ssq_buf)

        y = _dwconv(x_ref[0], wm_ref, bias_ref[...], H, W)      # (C, HW) f32
        conv_buf[n] = y                                          # persistent VMEM scratch
        sum_buf[...] += jnp.sum(y, axis=1, keepdims=True)        # per-channel BN partials
        ssq_buf[...] += jnp.sum(y * y, axis=1, keepdims=True)

    @pl.when(p == 1)
    def _phase_bn():
        inv_cnt = jnp.float32(1.0 / count)
        mean = sum_buf[...] * inv_cnt                            # (C, 1)
        var = jnp.maximum(ssq_buf[...] * inv_cnt - mean * mean, 0.0)   # biased var (PyTorch BN)
        g_inv = gamma_ref[...] * jax.lax.rsqrt(var + BN_EPS)
        shift = beta_ref[...] - mean * g_inv
        z = conv_buf[n] * g_inv + shift
        o_ref[0] = jnp.maximum(z, 0.0) + x_ref[0]                # ReLU + residual


def _global_mixer_fused(x_flat, wm, bias, gamma, beta, N, C, H, W, est_bytes):
    HW = H * W
    cparams = dict(dimension_semantics=("arbitrary", "arbitrary"))
    if est_bytes > (12 << 20):
        cparams["vmem_limit_bytes"] = min(int(est_bytes * 1.5), 60 << 20)
    return pl.pallas_call(
        functools.partial(_fused_kernel, H=H, W=W, count=float(N * HW)),
        out_shape=jax.ShapeDtypeStruct((N, C, HW), jnp.float32),
        grid=(2, N),
        in_specs=[
            pl.BlockSpec((KSIZE * KSIZE, C, HW), lambda p, n: (0, 0, 0)),   # wm (resident)
            pl.BlockSpec((C, 1), lambda p, n: (0, 0)),                      # conv bias
            pl.BlockSpec((C, 1), lambda p, n: (0, 0)),                      # gamma
            pl.BlockSpec((C, 1), lambda p, n: (0, 0)),                      # beta
            pl.BlockSpec((1, C, HW), lambda p, n: (n, 0, 0)),               # x
        ],
        # block index p*n: stays 0 during phase 0 -> no garbage HBM write-back before phase 1.
        out_specs=pl.BlockSpec((1, C, HW), lambda p, n: (p * n, 0, 0)),
        scratch_shapes=[
            pltpu.VMEM((N, C, HW), jnp.float32),    # conv intermediate, lives entirely in VMEM
            pltpu.VMEM((C, 1), jnp.float32),        # sum accumulator
            pltpu.VMEM((C, 1), jnp.float32),        # sum-of-squares accumulator
        ],
        compiler_params=pltpu.CompilerParams(**cparams),
    )(wm, bias, gamma, beta, x_flat)


# --------------------------- two-pass fallback (large shapes) ---------------------------
def _dwconv_stats_kernel(wm_ref, bias_ref, x_ref, y_ref, sum_ref, ssq_ref, *, H, W):
    y = _dwconv(x_ref[0], wm_ref, bias_ref[...], H, W)
    y_ref[0] = y.astype(y_ref.dtype)
    sum_ref[0] = jnp.sum(y, axis=1, keepdims=True)
    ssq_ref[0] = jnp.sum(y * y, axis=1, keepdims=True)


def _bn_relu_res_kernel(y_ref, x_ref, scale_ref, shift_ref, o_ref):
    z = y_ref[...].astype(jnp.float32) * scale_ref[...] + shift_ref[...]
    o_ref[...] = jnp.maximum(z, 0.0) + x_ref[...]


def _spatial_tile(C, HW, target_bytes=2 << 20):
    """Largest lane-aligned tile of the flattened spatial axis giving ~target_bytes blocks."""
    if HW % 128 != 0:
        return HW
    t = min(HW, max(128, (target_bytes // (4 * C)) // 128 * 128))
    while HW % t != 0:
        t -= 128
    return t


def _global_mixer_two_pass(x_flat, wm, bias, gamma, beta, N, C, H, W):
    HW = H * W
    # TODO(synk): for very large H*W the resident (49, C, HW) weight*mask tensor itself can exceed
    # VMEM; a spatially tiled (halo) variant of pass 1 would be needed there.
    pass1_bytes = 4 * (2 * KSIZE * KSIZE * C * HW + 6 * C * HW) + (64 << 10)
    cparams1 = dict(dimension_semantics=("parallel",))           # v7x: 2 TCs split the conv work
    if pass1_bytes > (12 << 20):
        cparams1["vmem_limit_bytes"] = min(int(pass1_bytes * 1.5), 60 << 20)

    conv_out, psum, pssq = pl.pallas_call(
        functools.partial(_dwconv_stats_kernel, H=H, W=W),
        out_shape=(
            jax.ShapeDtypeStruct((N, C, HW), jnp.float32),
            jax.ShapeDtypeStruct((N, C, 1), jnp.float32),
            jax.ShapeDtypeStruct((N, C, 1), jnp.float32),
        ),
        grid=(N,),
        in_specs=[
            pl.BlockSpec((KSIZE * KSIZE, C, HW), lambda n: (0, 0, 0)),
            pl.BlockSpec((C, 1), lambda n: (0, 0)),
            pl.BlockSpec((1, C, HW), lambda n: (n, 0, 0)),
        ],
        out_specs=(
            pl.BlockSpec((1, C, HW), lambda n: (n, 0, 0)),
            pl.BlockSpec((1, C, 1), lambda n: (n, 0, 0)),
            pl.BlockSpec((1, C, 1), lambda n: (n, 0, 0)),
        ),
        compiler_params=pltpu.CompilerParams(**cparams1),
    )(wm, bias, x_flat)

    # Tiny per-channel finalize (negligible work).
    cnt = jnp.float32(N * HW)
    mean = jnp.sum(psum[:, :, 0], axis=0) / cnt
    var = jnp.maximum(jnp.sum(pssq[:, :, 0], axis=0) / cnt - mean * mean, 0.0)
    g_inv = gamma[:, 0] * jax.lax.rsqrt(var + BN_EPS)
    scale = g_inv.reshape(C, 1)
    shift = (beta[:, 0] - mean * g_inv).reshape(C, 1)

    T = _spatial_tile(C, HW)                                     # ~MB-scale, lane-dense blocks
    return pl.pallas_call(
        _bn_relu_res_kernel,
        out_shape=jax.ShapeDtypeStruct((N, C, HW), jnp.float32),
        grid=(N, HW // T),
        in_specs=[
            pl.BlockSpec((1, C, T), lambda n, j: (n, 0, j)),
            pl.BlockSpec((1, C, T), lambda n, j: (n, 0, j)),
            pl.BlockSpec((C, 1), lambda n, j: (0, 0)),
            pl.BlockSpec((C, 1), lambda n, j: (0, 0)),
        ],
        out_specs=pl.BlockSpec((1, C, T), lambda n, j: (n, 0, j)),
        input_output_aliases={0: 0},        # write the result over the conv_out HBM buffer
        compiler_params=pltpu.CompilerParams(dimension_semantics=("parallel", "parallel")),
    )(conv_out, x_flat, scale, shift)


# ------------------------------------ helpers ------------------------------------
def _masked_tap_weights(w_oihw, H, W):
    """(49, C, H*W) f32: per-tap per-channel weight with the zero-padding mask folded in."""
    C = w_oihw.shape[0]
    HW = H * W
    hpos, wpos = np.divmod(np.arange(HW), W)
    masks = []
    for kh in range(KSIZE):
        for kw in range(KSIZE):
            dh, dw = kh - PAD, kw - PAD
            valid = ((hpos + dh >= 0) & (hpos + dh < H)
                     & (wpos + dw >= 0) & (wpos + dw < W))
            masks.append(valid)
    masks = jnp.asarray(np.stack(masks).astype(np.float32))                  # (49, HW)
    w_taps = jnp.transpose(w_oihw[:, 0, :, :], (1, 2, 0)).reshape(KSIZE * KSIZE, C)
    return w_taps.astype(jnp.float32)[:, :, None] * masks[:, None, :]        # (49, C, HW)


def _vmem_budget_bytes():
    try:
        cap = pltpu.get_tpu_info().vmem_capacity_bytes           # generation-aware (v7x = 64 MiB)
    except Exception:
        cap = 64 << 20                                           # conservative default
    return int(cap * 0.55)


# ------------------------------------ wrapper ------------------------------------
def global_mixer(x_nchw, w_oihw, conv_bias, gamma, beta, *, force_two_pass=False):
    """x_nchw: (N, C, H, W); w_oihw: (C, 1, 7, 7); conv_bias/gamma/beta: (C,)."""
    N, C, H, W = x_nchw.shape
    HW = H * W
    x_flat = x_nchw.reshape(N, C, HW).astype(jnp.float32)        # free reshape, no transpose

    wm = _masked_tap_weights(w_oihw, H, W)                       # (49, C, HW), computed once
    bias = conv_bias.reshape(C, 1).astype(jnp.float32)
    gamma2 = gamma.reshape(C, 1).astype(jnp.float32)
    beta2 = beta.reshape(C, 1).astype(jnp.float32)

    # Fused-kernel VMEM footprint: conv scratch + (double-buffered) wm + x/out blocks + slack.
    fused_bytes = 4 * (N * C * HW + 2 * KSIZE * KSIZE * C * HW + 4 * C * HW) + (64 << 10)

    if not force_two_pass and fused_bytes <= _vmem_budget_bytes():
        out = _global_mixer_fused(x_flat, wm, bias, gamma2, beta2, N, C, H, W, fused_bytes)
    else:
        out = _global_mixer_two_pass(x_flat, wm, bias, gamma2, beta2, N, C, H, W)
    return out.reshape(N, C, H, W)


# ------------------------------- reference (plain JAX) -------------------------------
def global_mixer_ref(x_nchw, w_oihw, conv_bias, gamma, beta):
    C = x_nchw.shape[1]
    y = jax.lax.conv_general_dilated(
        x_nchw, w_oihw, window_strides=(1, 1), padding=((PAD, PAD), (PAD, PAD)),
        feature_group_count=C, dimension_numbers=("NCHW", "OIHW", "NCHW"),
    ) + conv_bias.reshape(1, C, 1, 1)
    mean = jnp.mean(y, axis=(0, 2, 3), keepdims=True)
    var = jnp.mean(jnp.square(y - mean), axis=(0, 2, 3), keepdims=True)
    z = (y - mean) * jax.lax.rsqrt(var + BN_EPS) * gamma.reshape(1, C, 1, 1) + beta.reshape(1, C, 1, 1)
    return jnp.maximum(z, 0.0) + x_nchw


if __name__ == "__main__":
    N, C, H, W = 2, 8, 16, 16   # dim = 8 -> flattened spatial axis H*W = 256 lanes
    key = jax.random.PRNGKey(0)
    k_x, k_w, k_b, k_g, k_bt = jax.random.split(key, 5)

    x = jax.random.normal(k_x, (N, C, H, W), dtype=jnp.float32)
    w = jax.random.normal(k_w, (C, 1, KSIZE, KSIZE), dtype=jnp.float32) * 0.1  # Conv2d(dim,dim,7,groups=dim)
    conv_bias = jax.random.normal(k_b, (C,), dtype=jnp.float32) * 0.1
    gamma = 1.0 + 0.1 * jax.random.normal(k_g, (C,), dtype=jnp.float32)        # BN weight
    beta = 0.1 * jax.random.normal(k_bt, (C,), dtype=jnp.float32)              # BN bias

    ref = global_mixer_ref(x, w, conv_bias, gamma, beta)

    # Fused single-kernel path (default at these sizes).
    out_fused = jax.block_until_ready(jax.jit(global_mixer)(x, w, conv_bias, gamma, beta))
    assert out_fused.shape == (N, C, H, W)
    assert jnp.max(jnp.abs(out_fused - ref)) < 1e-4, "fused path mismatch vs reference"

    # Two-pass fallback path (exercised here to guarantee it also runs clean).
    out_two = jax.block_until_ready(
        jax.jit(functools.partial(global_mixer, force_two_pass=True))(x, w, conv_bias, gamma, beta))
    assert jnp.max(jnp.abs(out_two - ref)) < 1e-4, "two-pass path mismatch vs reference"

    # TODO(synk): BatchNorm running_mean/running_var buffer updates (training bookkeeping) are not
    # emitted; the forward output uses batch statistics, matching PyTorch training-mode behavior.
    print("KERNEL_OK")
</pallas_src>

<mosaic_0001>
module attributes {stable_mosaic.version = 11 : i64} {
  func.func @_fused_kernel(%arg0: i32, %arg1: i32, %arg2: memref<49x8x256xf32, #tpu.memory_space<vmem>>, %arg3: memref<8x1xf32, #tpu.memory_space<vmem>>, %arg4: memref<8x1xf32, #tpu.memory_space<vmem>>, %arg5: memref<8x1xf32, #tpu.memory_space<vmem>>, %arg6: memref<1x8x256xf32, #tpu.memory_space<vmem>>, %arg7: memref<1x8x256xf32, #tpu.memory_space<vmem>>, %arg8: memref<2x8x256xf32, #tpu.memory_space<vmem>>, %arg9: memref<8x1xf32, #tpu.memory_space<vmem>>, %arg10: memref<8x1xf32, #tpu.memory_space<vmem>>) attributes {dimension_semantics = [#tpu.dimension_semantics<arbitrary>, #tpu.dimension_semantics<arbitrary>], iteration_bounds = array<i64: 2, 2>, scalar_prefetch = 0 : i64, scratch_operands = 3 : i64, tpu.core_type = #tpu.core_type<tc>, window_params = [{pipeline_mode = #tpu.pipeline_mode<synchronous>, transform_indices = @transform_0, window_bounds = array<i64: 49, 8, 256>}, {pipeline_mode = #tpu.pipeline_mode<synchronous>, transform_indices = @transform_1, window_bounds = array<i64: 8, 1>}, {pipeline_mode = #tpu.pipeline_mode<synchronous>, transform_indices = @transform_2, window_bounds = array<i64: 8, 1>}, {pipeline_mode = #tpu.pipeline_mode<synchronous>, transform_indices = @transform_3, window_bounds = array<i64: 8, 1>}, {transform_indices = @transform_4, window_bounds = array<i64: 1, 8, 256>}, {transform_indices = @transform_5, window_bounds = array<i64: 1, 8, 256>}]} {
    %c0_i32 = arith.constant 0 : i32
    %0 = arith.cmpi eq, %arg0, %c0_i32 : i32
    %1 = arith.extui %0 : i1 to i32
    %c0_i32_0 = arith.constant 0 : i32
    %2 = arith.cmpi ne, %1, %c0_i32_0 : i32
    scf.if %2 {
      %c0_i32_2 = arith.constant 0 : i32
      %6 = arith.cmpi eq, %arg1, %c0_i32_2 : i32
      %7 = arith.extui %6 : i1 to i32
      %c0_i32_3 = arith.constant 0 : i32
      %8 = arith.cmpi ne, %7, %c0_i32_3 : i32
      scf.if %8 {
        %cst_120 = arith.constant 0.000000e+00 : f32
        %274 = vector.broadcast %cst_120 : f32 to vector<8x1xf32>
        %c0_121 = arith.constant 0 : index
        %c0_122 = arith.constant 0 : index
        %275 = vector.load %arg9[%c0_121, %c0_122] : memref<8x1xf32, #tpu.memory_space<vmem>>, vector<8x1xf32>
        tpu.vector_store %arg9[%c0_121, %c0_122], %274 {strides = array<i32>} : memref<8x1xf32, #tpu.memory_space<vmem>>, vector<8x1xf32>,
        %cst_123 = arith.constant 0.000000e+00 : f32
        %276 = vector.broadcast %cst_123 : f32 to vector<8x1xf32>
        %c0_124 = arith.constant 0 : index
        %c0_125 = arith.constant 0 : index
        %277 = vector.load %arg10[%c0_124, %c0_125] : memref<8x1xf32, #tpu.memory_space<vmem>>, vector<8x1xf32>
        tpu.vector_store %arg10[%c0_124, %c0_125], %276 {strides = array<i32>} : memref<8x1xf32, #tpu.memory_space<vmem>>, vector<8x1xf32>,
      } else {
      }
      %c0 = arith.constant 0 : index
      %c0_4 = arith.constant 0 : index
      %c0_5 = arith.constant 0 : index
      %9 = vector.load %arg6[%c0, %c0_4, %c0_5] : memref<1x8x256xf32, #tpu.memory_space<vmem>>, vector<1x8x256xf32>
      %10 = vector.shape_cast %9 : vector<1x8x256xf32> to vector<8x256xf32>
      %c0_6 = arith.constant 0 : index
      %c0_7 = arith.constant 0 : index
      %11 = vector.load %arg3[%c0_6, %c0_7] : memref<8x1xf32, #tpu.memory_space<vmem>>, vector<8x1xf32>
      %cst = arith.constant 0.000000e+00 : f32
      %12 = vector.broadcast %cst : f32 to vector<8x256xf32>
      %c51_i32 = arith.constant 51 : i32
      %13 = tpu.dynamic_rotate %10 by %c51_i32 dim 1 : vector<8x256xf32>, i32 -> vector<8x256xf32>
      %c0_8 = arith.constant 0 : index
      %c0_9 = arith.constant 0 : index
      %c0_10 = arith.constant 0 : index
      %14 = vector.load %arg2[%c0_8, %c0_9, %c0_10] : memref<49x8x256xf32, #tpu.memory_space<vmem>>, vector<1x8x256xf32>
      %15 = vector.shape_cast %14 : vector<1x8x256xf32> to vector<8x256xf32>
      %16 = arith.mulf %13, %15 : vector<8x256xf32>
      %17 = arith.addf %12, %16 : vector<8x256xf32>
      %c50_i32 = arith.constant 50 : i32
      %18 = tpu.dynamic_rotate %10 by %c50_i32 dim 1 : vector<8x256xf32>, i32 -> vector<8x256xf32>
      %c1 = arith.constant 1 : index
      %c0_11 = arith.constant 0 : index
      %c0_12 = arith.constant 0 : index
      %19 = vector.load %arg2[%c1, %c0_11, %c0_12] : memref<49x8x256xf32, #tpu.memory_space<vmem>>, vector<1x8x256xf32>
      %20 = vector.shape_cast %19 : vector<1x8x256xf32> to vector<8x256xf32>
      %21 = arith.mulf %18, %20 : vector<8x256xf32>
      %22 = arith.addf %17, %21 : vector<8x256xf32>
      %c49_i32 = arith.constant 49 : i32
      %23 = tpu.dynamic_rotate %10 by %c49_i32 dim 1 : vector<8x256xf32>, i32 -> vector<8x256xf32>
      %c2 = arith.constant 2 : index
      %c0_13 = arith.constant 0 : index
      %c0_14 = arith.constant 0 : index
      %24 = vector.load %arg2[%c2, %c0_13, %c0_14] : memref<49x8x256xf32, #tpu.memory_space<vmem>>, vector<1x8x256xf32>
      %25 = vector.shape_cast %24 : vector<1x8x256xf32> to vector<8x256xf32>
      %26 = arith.mulf %23, %25 : vector<8x256xf32>
      %27 = arith.addf %22, %26 : vector<8x256xf32>
      %c48_i32 = arith.constant 48 : i32
      %28 = tpu.dynamic_rotate %10 by %c48_i32 dim 1 : vector<8x256xf32>, i32 -> vector<8x256xf32>
      %c3 = arith.constant 3 : index
      %c0_15 = arith.constant 0 : index
      %c0_16 = arith.constant 0 : index
      %29 = vector.load %arg2[%c3, %c0_15, %c0_16] : memref<49x8x256xf32, #tpu.memory_space<vmem>>, vector<1x8x256xf32>
      %30 = vector.shape_cast %29 : vector<1x8x256xf32> to vector<8x256xf32>
      %31 = arith.mulf %28, %30 : vector<8x256xf32>
      %32 = arith.addf %27, %31 : vector<8x256xf32>
      %c47_i32 = arith.constant 47 : i32
      %33 = tpu.dynamic_rotate %10 by %c47_i32 dim 1 : vector<8x256xf32>, i32 -> vector<8x256xf32>
      %c4 = arith.constant 4 : index
      %c0_17 = arith.constant 0 : index
      %c0_18 = arith.constant 0 : index
      %34 = vector.load %arg2[%c4, %c0_17, %c0_18] : memref<49x8x256xf32, #tpu.memory_space<vmem>>, vector<1x8x256xf32>
      %35 = vector.shape_cast %34 : vector<1x8x256xf32> to vector<8x256xf32>
      %36 = arith.mulf %33, %35 : vector<8x256xf32>
      %37 = arith.addf %32, %36 : vector<8x256xf32>
      %c46_i32 = arith.constant 46 : i32
      %38 = tpu.dynamic_rotate %10 by %c46_i32 dim 1 : vector<8x256xf32>, i32 -> vector<8x256xf32>
      %c5 = arith.constant 5 : index
      %c0_19 = arith.constant 0 : index
      %c0_20 = arith.constant 0 : index
      %39 = vector.load %arg2[%c5, %c0_19, %c0_20] : memref<49x8x256xf32, #tpu.memory_space<vmem>>, vector<1x8x256xf32>
      %40 = vector.shape_cast %39 : vector<1x8x256xf32> to vector<8x256xf32>
      %41 = arith.mulf %38, %40 : vector<8x256xf32>
      %42 = arith.addf %37, %41 : vector<8x256xf32>
      %c45_i32 = arith.constant 45 : i32
      %43 = tpu.dynamic_rotate %10 by %c45_i32 dim 1 : vector<8x256xf32>, i32 -> vector<8x256xf32>
      %c6 = arith.constant 6 : index
      %c0_21 = arith.constant 0 : index
      %c0_22 = arith.constant 0 : index
      %44 = vector.load %arg2[%c6, %c0_21, %c0_22] : memref<49x8x256xf32, #tpu.memory_space<vmem>>, vector<1x8x256xf32>
      %45 = vector.shape_cast %44 : vector<1x8x256xf32> to vector<8x256xf32>
      %46 = arith.mulf %43, %45 : vector<8x256xf32>
      %47 = arith.addf %42, %46 : vector<8x256xf32>
      %c35_i32 = arith.constant 35 : i32
      %48 = tpu.dynamic_rotate %10 by %c35_i32 dim 1 : vector<8x256xf32>, i32 -> vector<8x256xf32>
      %c7 = arith.constant 7 : index
      %c0_23 = arith.constant 0 : index
      %c0_24 = arith.constant 0 : index
      %49 = vector.load %arg2[%c7, %c0_23, %c0_24] : memref<49x8x256xf32, #tpu.memory_space<vmem>>, vector<1x8x256xf32>
      %50 = vector.shape_cast %49 : vector<1x8x256xf32> to vector<8x256xf32>
      %51 = arith.mulf %48, %50 : vector<8x256xf32>
      %52 = arith.addf %47, %51 : vector<8x256xf32>
      %c34_i32 = arith.constant 34 : i32
      %53 = tpu.dynamic_rotate %10 by %c34_i32 dim 1 : vector<8x256xf32>, i32 -> vector<8x256xf32>
      %c8 = arith.constant 8 : index
      %c0_25 = arith.constant 0 : index
      %c0_26 = arith.constant 0 : index
      %54 = vector.load %arg2[%c8, %c0_25, %c0_26] : memref<49x8x256xf32, #tpu.memory_space<vmem>>, vector<1x8x256xf32>
      %55 = vector.shape_cast %54 : vector<1x8x256xf32> to vector<8x256xf32>
      %56 = arith.mulf %53, %55 : vector<8x256xf32>
      %57 = arith.addf %52, %56 : vector<8x256xf32>
      %c33_i32 = arith.constant 33 : i32
      %58 = tpu.dynamic_rotate %10 by %c33_i32 dim 1 : vector<8x256xf32>, i32 -> vector<8x256xf32>
      %c9 = arith.constant 9 : index
      %c0_27 = arith.constant 0 : index
      %c0_28 = arith.constant 0 : index
      %59 = vector.load %arg2[%c9, %c0_27, %c0_28] : memref<49x8x256xf32, #tpu.memory_space<vmem>>, vector<1x8x256xf32>
      %60 = vector.shape_cast %59 : vector<1x8x256xf32> to vector<8x256xf32>
      %61 = arith.mulf %58, %60 : vector<8x256xf32>
      %62 = arith.addf %57, %61 : vector<8x256xf32>
      %c32_i32 = arith.constant 32 : i32
      %63 = tpu.dynamic_rotate %10 by %c32_i32 dim 1 : vector<8x256xf32>, i32 -> vector<8x256xf32>
      %c10 = arith.constant 10 : index
      %c0_29 = arith.constant 0 : index
      %c0_30 = arith.constant 0 : index
      %64 = vector.load %arg2[%c10, %c0_29, %c0_30] : memref<49x8x256xf32, #tpu.memory_space<vmem>>, vector<1x8x256xf32>
      %65 = vector.shape_cast %64 : vector<1x8x256xf32> to vector<8x256xf32>
      %66 = arith.mulf %63, %65 : vector<8x256xf32>
      %67 = arith.addf %62, %66 : vector<8x256xf32>
      %c31_i32 = arith.constant 31 : i32
      %68 = tpu.dynamic_rotate %10 by %c31_i32 dim 1 : vector<8x256xf32>, i32 -> vector<8x256xf32>
      %c11 = arith.constant 11 : index
      %c0_31 = arith.constant 0 : index
      %c0_32 = arith.constant 0 : index
      %69 = vector.load %arg2[%c11, %c0_31, %c0_32] : memref<49x8x256xf32, #tpu.memory_space<vmem>>, vector<1x8x256xf32>
      %70 = vector.shape_cast %69 : vector<1x8x256xf32> to vector<8x256xf32>
      %71 = arith.mulf %68, %70 : vector<8x256xf32>
      %72 = arith.addf %67, %71 : vector<8x256xf32>
      %c30_i32 = arith.constant 30 : i32
      %73 = tpu.dynamic_rotate %10 by %c30_i32 dim 1 : vector<8x256xf32>, i32 -> vector<8x256xf32>
      %c12 = arith.constant 12 : index
      %c0_33 = arith.constant 0 : index
      %c0_34 = arith.constant 0 : index
      %74 = vector.load %arg2[%c12, %c0_33, %c0_34] : memref<49x8x256xf32, #tpu.memory_space<vmem>>, vector<1x8x256xf32>
      %75 = vector.shape_cast %74 : vector<1x8x256xf32> to vector<8x256xf32>
      %76 = arith.mulf %73, %75 : vector<8x256xf32>
      %77 = arith.addf %72, %76 : vector<8x256xf32>
      %c29_i32 = arith.constant 29 : i32
      %78 = tpu.dynamic_rotate %10 by %c29_i32 dim 1 : vector<8x256xf32>, i32 -> vector<8x256xf32>
      %c13 = arith.constant 13 : index
      %c0_35 = arith.constant 0 : index
      %c0_36 = arith.constant 0 : index
      %79 = vector.load %arg2[%c13, %c0_35, %c0_36] : memref<49x8x256xf32, #tpu.memory_space<vmem>>, vector<1x8x256xf32>
      %80 = vector.shape_cast %79 : vector<1x8x256xf32> to vector<8x256xf32>
      %81 = arith.mulf %78, %80 : vector<8x256xf32>
      %82 = arith.addf %77, %81 : vector<8x256xf32>
      %c19_i32 = arith.constant 19 : i32
      %83 = tpu.dynamic_rotate %10 by %c19_i32 dim 1 : vector<8x256xf32>, i32 -> vector<8x256xf32>
      %c14 = arith.constant 14 : index
      %c0_37 = arith.constant 0 : index
      %c0_38 = arith.constant 0 : index
      %84 = vector.load %arg2[%c14, %c0_37, %c0_38] : memref<49x8x256xf32, #tpu.memory_space<vmem>>, vector<1x8x256xf32>
      %85 = vector.shape_cast %84 : vector<1x8x256xf32> to vector<8x256xf32>
      %86 = arith.mulf %83, %85 : vector<8x256xf32>
      %87 = arith.addf %82, %86 : vector<8x256xf32>
      %c18_i32 = arith.constant 18 : i32
      %88 = tpu.dynamic_rotate %10 by %c18_i32 dim 1 : vector<8x256xf32>, i32 -> vector<8x256xf32>
      %c15 = arith.constant 15 : index
      %c0_39 = arith.constant 0 : index
      %c0_40 = arith.constant 0 : index
      %89 = vector.load %arg2[%c15, %c0_39, %c0_40] : memref<49x8x256xf32, #tpu.memory_space<vmem>>, vector<1x8x256xf32>
      %90 = vector.shape_cast %89 : vector<1x8x256xf32> to vector<8x256xf32>
      %91 = arith.mulf %88, %90 : vector<8x256xf32>
      %92 = arith.addf %87, %91 : vector<8x256xf32>
      %c17_i32 = arith.constant 17 : i32
      %93 = tpu.dynamic_rotate %10 by %c17_i32 dim 1 : vector<8x256xf32>, i32 -> vector<8x256xf32>
      %c16 = arith.constant 16 : index
      %c0_41 = arith.constant 0 : index
      %c0_42 = arith.constant 0 : index
      %94 = vector.load %arg2[%c16, %c0_41, %c0_42] : memref<49x8x256xf32, #tpu.memory_space<vmem>>, vector<1x8x256xf32>
      %95 = vector.shape_cast %94 : vector<1x8x256xf32> to vector<8x256xf32>
      %96 = arith.mulf %93, %95 : vector<8x256xf32>
      %97 = arith.addf %92, %96 : vector<8x256xf32>
      %c16_i32 = arith.constant 16 : i32
      %98 = tpu.dynamic_rotate %10 by %c16_i32 dim 1 : vector<8x256xf32>, i32 -> vector<8x256xf32>
      %c17 = arith.constant 17 : index
      %c0_43 = arith.constant 0 : index
      %c0_44 = arith.constant 0 : index
      %99 = vector.load %arg2[%c17, %c0_43, %c0_44] : memref<49x8x256xf32, #tpu.memory_space<vmem>>, vector<1x8x256xf32>
      %100 = vector.shape_cast %99 : vector<1x8x256xf32> to vector<8x256xf32>
      %101 = arith.mulf %98, %100 : vector<8x256xf32>
      %102 = arith.addf %97, %101 : vector<8x256xf32>
      %c15_i32 = arith.constant 15 : i32
      %103 = tpu.dynamic_rotate %10 by %c15_i32 dim 1 : vector<8x256xf32>, i32 -> vector<8x256xf32>
      %c18 = arith.constant 18 : index
      %c0_45 = arith.constant 0 : index
      %c0_46 = arith.constant 0 : index
      %104 = vector.load %arg2[%c18, %c0_45, %c0_46] : memref<49x8x256xf32, #tpu.memory_space<vmem>>, vector<1x8x256xf32>
      %105 = vector.shape_cast %104 : vector<1x8x256xf32> to vector<8x256xf32>
      %106 = arith.mulf %103, %105 : vector<8x256xf32>
      %107 = arith.addf %102, %106 : vector<8x256xf32>
      %c14_i32 = arith.constant 14 : i32
      %108 = tpu.dynamic_rotate %10 by %c14_i32 dim 1 : vector<8x256xf32>, i32 -> vector<8x256xf32>
      %c19 = arith.constant 19 : index
      %c0_47 = arith.constant 0 : index
      %c0_48 = arith.constant 0 : index
      %109 = vector.load %arg2[%c19, %c0_47, %c0_48] : memref<49x8x256xf32, #tpu.memory_space<vmem>>, vector<1x8x256xf32>
      %110 = vector.shape_cast %109 : vector<1x8x256xf32> to vector<8x256xf32>
      %111 = arith.mulf %108, %110 : vector<8x256xf32>
      %112 = arith.addf %107, %111 : vector<8x256xf32>
      %c13_i32 = arith.constant 13 : i32
      %113 = tpu.dynamic_rotate %10 by %c13_i32 dim 1 : vector<8x256xf32>, i32 -> vector<8x256xf32>
      %c20 = arith.constant 20 : index
      %c0_49 = arith.constant 0 : index
      %c0_50 = arith.constant 0 : index
      %114 = vector.load %arg2[%c20, %c0_49, %c0_50] : memref<49x8x256xf32, #tpu.memory_space<vmem>>, vector<1x8x256xf32>
      %115 = vector.shape_cast %114 : vector<1x8x256xf32> to vector<8x256xf32>
      %116 = arith.mulf %113, %115 : vector<8x256xf32>
      %117 = arith.addf %112, %116 : vector<8x256xf32>
      %c3_i32 = arith.constant 3 : i32
      %118 = tpu.dynamic_rotate %10 by %c3_i32 dim 1 : vector<8x256xf32>, i32 -> vector<8x256xf32>
      %c21 = arith.constant 21 : index
      %c0_51 = arith.constant 0 : index
      %c0_52 = arith.constant 0 : index
      %119 = vector.load %arg2[%c21, %c0_51, %c0_52] : memref<49x8x256xf32, #tpu.memory_space<vmem>>, vector<1x8x256xf32>
      %120 = vector.shape_cast %119 : vector<1x8x256xf32> to vector<8x256xf32>
      %121 = arith.mulf %118, %120 : vector<8x256xf32>
      %122 = arith.addf %117, %121 : vector<8x256xf32>
      %c2_i32 = arith.constant 2 : i32
      %123 = tpu.dynamic_rotate %10 by %c2_i32 dim 1 : vector<8x256xf32>, i32 -> vector<8x256xf32>
      %c22 = arith.constant 22 : index
      %c0_53 = arith.constant 0 : index
      %c0_54 = arith.constant 0 : index
      %124 = vector.load %arg2[%c22, %c0_53, %c0_54] : memref<49x8x256xf32, #tpu.memory_space<vmem>>, vector<1x8x256xf32>
      %125 = vector.shape_cast %124 : vector<1x8x256xf32> to vector<8x256xf32>
      %126 = arith.mulf %123, %125 : vector<8x256xf32>
      %127 = arith.addf %122, %126 : vector<8x256xf32>
      %c1_i32_55 = arith.constant 1 : i32
      %128 = tpu.dynamic_rotate %10 by %c1_i32_55 dim 1 : vector<8x256xf32>, i32 -> vector<8x256xf32>
      %c23 = arith.constant 23 : index
      %c0_56 = arith.constant 0 : index
      %c0_57 = arith.constant 0 : index
      %129 = vector.load %arg2[%c23, %c0_56, %c0_57] : memref<49x8x256xf32, #tpu.memory_space<vmem>>, vector<1x8x256xf32>
      %130 = vector.shape_cast %129 : vector<1x8x256xf32> to vector<8x256xf32>
      %131 = arith.mulf %128, %130 : vector<8x256xf32>
      %132 = arith.addf %127, %131 : vector<8x256xf32>
      %c24 = arith.constant 24 : index
      %c0_58 = arith.constant 0 : index
      %c0_59 = arith.constant 0 : index
      %133 = vector.load %arg2[%c24, %c0_58, %c0_59] : memref<49x8x256xf32, #tpu.memory_space<vmem>>, vector<1x8x256xf32>
      %134 = vector.shape_cast %133 : vector<1x8x256xf32> to vector<8x256xf32>
      %135 = arith.mulf %10, %134 : vector<8x256xf32>
      %136 = arith.addf %132, %135 : vector<8x256xf32>
      %c255_i32 = arith.constant 255 : i32
      %137 = tpu.dynamic_rotate %10 by %c255_i32 dim 1 : vector<8x256xf32>, i32 -> vector<8x256xf32>
      %c25 = arith.constant 25 : index
      %c0_60 = arith.constant 0 : index
      %c0_61 = arith.constant 0 : index
      %138 = vector.load %arg2[%c25, %c0_60, %c0_61] : memref<49x8x256xf32, #tpu.memory_space<vmem>>, vector<1x8x256xf32>
      %139 = vector.shape_cast %138 : vector<1x8x256xf32> to vector<8x256xf32>
      %140 = arith.mulf %137, %139 : vector<8x256xf32>
      %141 = arith.addf %136, %140 : vector<8x256xf32>
      %c254_i32 = arith.constant 254 : i32
      %142 = tpu.dynamic_rotate %10 by %c254_i32 dim 1 : vector<8x256xf32>, i32 -> vector<8x256xf32>
      %c26 = arith.constant 26 : index
      %c0_62 = arith.constant 0 : index
      %c0_63 = arith.constant 0 : index
      %143 = vector.load %arg2[%c26, %c0_62, %c0_63] : memref<49x8x256xf32, #tpu.memory_space<vmem>>, vector<1x8x256xf32>
      %144 = vector.shape_cast %143 : vector<1x8x256xf32> to vector<8x256xf32>
      %145 = arith.mulf %142, %144 : vector<8x256xf32>
      %146 = arith.addf %141, %145 : vector<8x256xf32>
      %c253_i32 = arith.constant 253 : i32
      %147 = tpu.dynamic_rotate %10 by %c253_i32 dim 1 : vector<8x256xf32>, i32 -> vector<8x256xf32>
      %c27 = arith.constant 27 : index
      %c0_64 = arith.constant 0 : index
      %c0_65 = arith.constant 0 : index
      %148 = vector.load %arg2[%c27, %c0_64, %c0_65] : memref<49x8x256xf32, #tpu.memory_space<vmem>>, vector<1x8x256xf32>
      %149 = vector.shape_cast %148 : vector<1x8x256xf32> to vector<8x256xf32>
      %150 = arith.mulf %147, %149 : vector<8x256xf32>
      %151 = arith.addf %146, %150 : vector<8x256xf32>
      %c243_i32 = arith.constant 243 : i32
      %152 = tpu.dynamic_rotate %10 by %c243_i32 dim 1 : vector<8x256xf32>, i32 -> vector<8x256xf32>
      %c28 = arith.constant 28 : index
      %c0_66 = arith.constant 0 : index
      %c0_67 = arith.constant 0 : index
      %153 = vector.load %arg2[%c28, %c0_66, %c0_67] : memref<49x8x256xf32, #tpu.memory_space<vmem>>, vector<1x8x256xf32>
      %154 = vector.shape_cast %153 : vector<1x8x256xf32> to vector<8x256xf32>
      %155 = arith.mulf %152, %154 : vector<8x256xf32>
      %156 = arith.addf %151, %155 : vector<8x256xf32>
      %c242_i32 = arith.constant 242 : i32
      %157 = tpu.dynamic_rotate %10 by %c242_i32 dim 1 : vector<8x256xf32>, i32 -> vector<8x256xf32>
      %c29 = arith.constant 29 : index
      %c0_68 = arith.constant 0 : index
      %c0_69 = arith.constant 0 : index
      %158 = vector.load %arg2[%c29, %c0_68, %c0_69] : memref<49x8x256xf32, #tpu.memory_space<vmem>>, vector<1x8x256xf32>
      %159 = vector.shape_cast %158 : vector<1x8x256xf32> to vector<8x256xf32>
      %160 = arith.mulf %157, %159 : vector<8x256xf32>
      %161 = arith.addf %156, %160 : vector<8x256xf32>
      %c241_i32 = arith.constant 241 : i32
      %162 = tpu.dynamic_rotate %10 by %c241_i32 dim 1 : vector<8x256xf32>, i32 -> vector<8x256xf32>
      %c30 = arith.constant 30 : index
      %c0_70 = arith.constant 0 : index
      %c0_71 = arith.constant 0 : index
      %163 = vector.load %arg2[%c30, %c0_70, %c0_71] : memref<49x8x256xf32, #tpu.memory_space<vmem>>, vector<1x8x256xf32>
      %164 = vector.shape_cast %163 : vector<1x8x256xf32> to vector<8x256xf32>
      %165 = arith.mulf %162, %164 : vector<8x256xf32>
      %166 = arith.addf %161, %165 : vector<8x256xf32>
      %c240_i32 = arith.constant 240 : i32
      %167 = tpu.dynamic_rotate %10 by %c240_i32 dim 1 : vector<8x256xf32>, i32 -> vector<8x256xf32>
      %c31 = arith.constant 31 : index
      %c0_72 = arith.constant 0 : index
      %c0_73 = arith.constant 0 : index
      %168 = vector.load %arg2[%c31, %c0_72, %c0_73] : memref<49x8x256xf32, #tpu.memory_space<vmem>>, vector<1x8x256xf32>
      %169 = vector.shape_cast %168 : vector<1x8x256xf32> to vector<8x256xf32>
      %170 = arith.mulf %167, %169 : vector<8x256xf32>
      %171 = arith.addf %166, %170 : vector<8x256xf32>
      %c239_i32 = arith.constant 239 : i32
      %172 = tpu.dynamic_rotate %10 by %c239_i32 dim 1 : vector<8x256xf32>, i32 -> vector<8x256xf32>
      %c32 = arith.constant 32 : index
      %c0_74 = arith.constant 0 : index
      %c0_75 = arith.constant 0 : index
      %173 = vector.load %arg2[%c32, %c0_74, %c0_75] : memref<49x8x256xf32, #tpu.memory_space<vmem>>, vector<1x8x256xf32>
      %174 = vector.shape_cast %173 : vector<1x8x256xf32> to vector<8x256xf32>
      %175 = arith.mulf %172, %174 : vector<8x256xf32>
      %176 = arith.addf %171, %175 : vector<8x256xf32>
      %c238_i32 = arith.constant 238 : i32
      %177 = tpu.dynamic_rotate %10 by %c238_i32 dim 1 : vector<8x256xf32>, i32 -> vector<8x256xf32>
      %c33 = arith.constant 33 : index
      %c0_76 = arith.constant 0 : index
      %c0_77 = arith.constant 0 : index
      %178 = vector.load %arg2[%c33, %c0_76, %c0_77] : memref<49x8x256xf32, #tpu.memory_space<vmem>>, vector<1x8x256xf32>
      %179 = vector.shape_cast %178 : vector<1x8x256xf32> to vector<8x256xf32>
      %180 = arith.mulf %177, %179 : vector<8x256xf32>
      %181 = arith.addf %176, %180 : vector<8x256xf32>
      %c237_i32 = arith.constant 237 : i32
      %182 = tpu.dynamic_rotate %10 by %c237_i32 dim 1 : vector<8x256xf32>, i32 -> vector<8x256xf32>
      %c34 = arith.constant 34 : index
      %c0_78 = arith.constant 0 : index
      %c0_79 = arith.constant 0 : index
      %183 = vector.load %arg2[%c34, %c0_78, %c0_79] : memref<49x8x256xf32, #tpu.memory_space<vmem>>, vector<1x8x256xf32>
      %184 = vector.shape_cast %183 : vector<1x8x256xf32> to vector<8x256xf32>
      %185 = arith.mulf %182, %184 : vector<8x256xf32>
      %186 = arith.addf %181, %185 : vector<8x256xf32>
      %c227_i32 = arith.constant 227 : i32
      %187 = tpu.dynamic_rotate %10 by %c227_i32 dim 1 : vector<8x256xf32>, i32 -> vector<8x256xf32>
      %c35 = arith.constant 35 : index
      %c0_80 = arith.constant 0 : index
      %c0_81 = arith.constant 0 : index
      %188 = vector.load %arg2[%c35, %c0_80, %c0_81] : memref<49x8x256xf32, #tpu.memory_space<vmem>>, vector<1x8x256xf32>
      %189 = vector.shape_cast %188 : vector<1x8x256xf32> to vector<8x256xf32>
      %190 = arith.mulf %187, %189 : vector<8x256xf32>
      %191 = arith.addf %186, %190 : vector<8x256xf32>
      %c226_i32 = arith.constant 226 : i32
      %192 = tpu.dynamic_rotate %10 by %c226_i32 dim 1 : vector<8x256xf32>, i32 -> vector<8x256xf32>
      %c36 = arith.constant 36 : index
      %c0_82 = arith.constant 0 : index
      %c0_83 = arith.constant 0 : index
      %193 = vector.load %arg2[%c36, %c0_82, %c0_83] : memref<49x8x256xf32, #tpu.memory_space<vmem>>, vector<1x8x256xf32>
      %194 = vector.shape_cast %193 : vector<1x8x256xf32> to vector<8x256xf32>
      %195 = arith.mulf %192, %194 : vector<8x256xf32>
      %196 = arith.addf %191, %195 : vector<8x256xf32>
      %c225_i32 = arith.constant 225 : i32
      %197 = tpu.dynamic_rotate %10 by %c225_i32 dim 1 : vector<8x256xf32>, i32 -> vector<8x256xf32>
      %c37 = arith.constant 37 : index
      %c0_84 = arith.constant 0 : index
      %c0_85 = arith.constant 0 : index
      %198 = vector.load %arg2[%c37, %c0_84, %c0_85] : memref<49x8x256xf32, #tpu.memory_space<vmem>>, vector<1x8x256xf32>
      %199 = vector.shape_cast %198 : vector<1x8x256xf32> to vector<8x256xf32>
      %200 = arith.mulf %197, %199 : vector<8x256xf32>
      %201 = arith.addf %196, %200 : vector<8x256xf32>
      %c224_i32 = arith.constant 224 : i32
      %202 = tpu.dynamic_rotate %10 by %c224_i32 dim 1 : vector<8x256xf32>, i32 -> vector<8x256xf32>
      %c38 = arith.constant 38 : index
      %c0_86 = arith.constant 0 : index
      %c0_87 = arith.constant 0 : index
      %203 = vector.load %arg2[%c38, %c0_86, %c0_87] : memref<49x8x256xf32, #tpu.memory_space<vmem>>, vector<1x8x256xf32>
      %204 = vector.shape_cast %203 : vector<1x8x256xf32> to vector<8x256xf32>
      %205 = arith.mulf %202, %204 : vector<8x256xf32>
      %206 = arith.addf %201, %205 : vector<8x256xf32>
      %c223_i32 = arith.constant 223 : i32
      %207 = tpu.dynamic_rotate %10 by %c223_i32 dim 1 : vector<8x256xf32>, i32 -> vector<8x256xf32>
      %c39 = arith.constant 39 : index
      %c0_88 = arith.constant 0 : index
      %c0_89 = arith.constant 0 : index
      %208 = vector.load %arg2[%c39, %c0_88, %c0_89] : memref<49x8x256xf32, #tpu.memory_space<vmem>>, vector<1x8x256xf32>
      %209 = vector.shape_cast %208 : vector<1x8x256xf32> to vector<8x256xf32>
      %210 = arith.mulf %207, %209 : vector<8x256xf32>
      %211 = arith.addf %206, %210 : vector<8x256xf32>
      %c222_i32 = arith.constant 222 : i32
      %212 = tpu.dynamic_rotate %10 by %c222_i32 dim 1 : vector<8x256xf32>, i32 -> vector<8x256xf32>
      %c40 = arith.constant 40 : index
      %c0_90 = arith.constant 0 : index
      %c0_91 = arith.constant 0 : index
      %213 = vector.load %arg2[%c40, %c0_90, %c0_91] : memref<49x8x256xf32, #tpu.memory_space<vmem>>, vector<1x8x256xf32>
      %214 = vector.shape_cast %213 : vector<1x8x256xf32> to vector<8x256xf32>
      %215 = arith.mulf %212, %214 : vector<8x256xf32>
      %216 = arith.addf %211, %215 : vector<8x256xf32>
      %c221_i32 = arith.constant 221 : i32
      %217 = tpu.dynamic_rotate %10 by %c221_i32 dim 1 : vector<8x256xf32>, i32 -> vector<8x256xf32>
      %c41 = arith.constant 41 : index
      %c0_92 = arith.constant 0 : index
      %c0_93 = arith.constant 0 : index
      %218 = vector.load %arg2[%c41, %c0_92, %c0_93] : memref<49x8x256xf32, #tpu.memory_space<vmem>>, vector<1x8x256xf32>
      %219 = vector.shape_cast %218 : vector<1x8x256xf32> to vector<8x256xf32>
      %220 = arith.mulf %217, %219 : vector<8x256xf32>
      %221 = arith.addf %216, %220 : vector<8x256xf32>
      %c211_i32 = arith.constant 211 : i32
      %222 = tpu.dynamic_rotate %10 by %c211_i32 dim 1 : vector<8x256xf32>, i32 -> vector<8x256xf32>
      %c42 = arith.constant 42 : index
      %c0_94 = arith.constant 0 : index
      %c0_95 = arith.constant 0 : index
      %223 = vector.load %arg2[%c42, %c0_94, %c0_95] : memref<49x8x256xf32, #tpu.memory_space<vmem>>, vector<1x8x256xf32>
      %224 = vector.shape_cast %223 : vector<1x8x256xf32> to vector<8x256xf32>
      %225 = arith.mulf %222, %224 : vector<8x256xf32>
      %226 = arith.addf %221, %225 : vector<8x256xf32>
      %c210_i32 = arith.constant 210 : i32
      %227 = tpu.dynamic_rotate %10 by %c210_i32 dim 1 : vector<8x256xf32>, i32 -> vector<8x256xf32>
      %c43 = arith.constant 43 : index
      %c0_96 = arith.constant 0 : index
      %c0_97 = arith.constant 0 : index
      %228 = vector.load %arg2[%c43, %c0_96, %c0_97] : memref<49x8x256xf32, #tpu.memory_space<vmem>>, vector<1x8x256xf32>
      %229 = vector.shape_cast %228 : vector<1x8x256xf32> to vector<8x256xf32>
      %230 = arith.mulf %227, %229 : vector<8x256xf32>
      %231 = arith.addf %226, %230 : vector<8x256xf32>
      %c209_i32 = arith.constant 209 : i32
      %232 = tpu.dynamic_rotate %10 by %c209_i32 dim 1 : vector<8x256xf32>, i32 -> vector<8x256xf32>
      %c44 = arith.constant 44 : index
      %c0_98 = arith.constant 0 : index
      %c0_99 = arith.constant 0 : index
      %233 = vector.load %arg2[%c44, %c0_98, %c0_99] : memref<49x8x256xf32, #tpu.memory_space<vmem>>, vector<1x8x256xf32>
      %234 = vector.shape_cast %233 : vector<1x8x256xf32> to vector<8x256xf32>
      %235 = arith.mulf %232, %234 : vector<8x256xf32>
      %236 = arith.addf %231, %235 : vector<8x256xf32>
      %c208_i32 = arith.constant 208 : i32
      %237 = tpu.dynamic_rotate %10 by %c208_i32 dim 1 : vector<8x256xf32>, i32 -> vector<8x256xf32>
      %c45 = arith.constant 45 : index
      %c0_100 = arith.constant 0 : index
      %c0_101 = arith.constant 0 : index
      %238 = vector.load %arg2[%c45, %c0_100, %c0_101] : memref<49x8x256xf32, #tpu.memory_space<vmem>>, vector<1x8x256xf32>
      %239 = vector.shape_cast %238 : vector<1x8x256xf32> to vector<8x256xf32>
      %240 = arith.mulf %237, %239 : vector<8x256xf32>
      %241 = arith.addf %236, %240 : vector<8x256xf32>
      %c207_i32 = arith.constant 207 : i32
      %242 = tpu.dynamic_rotate %10 by %c207_i32 dim 1 : vector<8x256xf32>, i32 -> vector<8x256xf32>
      %c46 = arith.constant 46 : index
      %c0_102 = arith.constant 0 : index
      %c0_103 = arith.constant 0 : index
      %243 = vector.load %arg2[%c46, %c0_102, %c0_103] : memref<49x8x256xf32, #tpu.memory_space<vmem>>, vector<1x8x256xf32>
      %244 = vector.shape_cast %243 : vector<1x8x256xf32> to vector<8x256xf32>
      %245 = arith.mulf %242, %244 : vector<8x256xf32>
      %246 = arith.addf %241, %245 : vector<8x256xf32>
      %c206_i32 = arith.constant 206 : i32
      %247 = tpu.dynamic_rotate %10 by %c206_i32 dim 1 : vector<8x256xf32>, i32 -> vector<8x256xf32>
      %c47 = arith.constant 47 : index
      %c0_104 = arith.constant 0 : index
      %c0_105 = arith.constant 0 : index
      %248 = vector.load %arg2[%c47, %c0_104, %c0_105] : memref<49x8x256xf32, #tpu.memory_space<vmem>>, vector<1x8x256xf32>
      %249 = vector.shape_cast %248 : vector<1x8x256xf32> to vector<8x256xf32>
      %250 = arith.mulf %247, %249 : vector<8x256xf32>
      %251 = arith.addf %246, %250 : vector<8x256xf32>
      %c205_i32 = arith.constant 205 : i32
      %252 = tpu.dynamic_rotate %10 by %c205_i32 dim 1 : vector<8x256xf32>, i32 -> vector<8x256xf32>
      %c48 = arith.constant 48 : index
      %c0_106 = arith.constant 0 : index
      %c0_107 = arith.constant 0 : index
      %253 = vector.load %arg2[%c48, %c0_106, %c0_107] : memref<49x8x256xf32, #tpu.memory_space<vmem>>, vector<1x8x256xf32>
      %254 = vector.shape_cast %253 : vector<1x8x256xf32> to vector<8x256xf32>
      %255 = arith.mulf %252, %254 : vector<8x256xf32>
      %256 = arith.addf %251, %255 : vector<8x256xf32>
      %257 = vector.broadcast %11 : vector<8x1xf32> to vector<8x256xf32>
      %258 = arith.addf %256, %257 : vector<8x256xf32>
      %259 = arith.index_cast %arg1 : i32 to index
      %c0_108 = arith.constant 0 : index
      %c0_109 = arith.constant 0 : index
      %260 = vector.load %arg8[%259, %c0_108, %c0_109] : memref<2x8x256xf32, #tpu.memory_space<vmem>>, vector<1x8x256xf32>
      %261 = vector.shape_cast %260 : vector<1x8x256xf32> to vector<8x256xf32>
      %262 = vector.shape_cast %258 : vector<8x256xf32> to vector<1x8x256xf32>
      tpu.vector_store %arg8[%259, %c0_108, %c0_109], %262 {strides = array<i32>} : memref<2x8x256xf32, #tpu.memory_space<vmem>>, vector<1x8x256xf32>,
      %c0_110 = arith.constant 0 : index
      %c0_111 = arith.constant 0 : index
      %263 = vector.load %arg9[%c0_110, %c0_111] : memref<8x1xf32, #tpu.memory_space<vmem>>, vector<8x1xf32>
      %cst_112 = arith.constant dense<0.000000e+00> : vector<8xf32>
      %264 = vector.multi_reduction <add>, %258, %cst_112 [1] : vector<8x256xf32> to vector<8xf32>
      %265 = vector.shape_cast %264 : vector<8xf32> to vector<8x1xf32>
      %266 = arith.addf %263, %265 : vector<8x1xf32>
      %c0_113 = arith.constant 0 : index
      %c0_114 = arith.constant 0 : index
      %267 = vector.load %arg9[%c0_113, %c0_114] : memref<8x1xf32, #tpu.memory_space<vmem>>, vector<8x1xf32>
      tpu.vector_store %arg9[%c0_113, %c0_114], %266 {strides = array<i32>} : memref<8x1xf32, #tpu.memory_space<vmem>>, vector<8x1xf32>,
      %c0_115 = arith.constant 0 : index
      %c0_116 = arith.constant 0 : index
      %268 = vector.load %arg10[%c0_115, %c0_116] : memref<8x1xf32, #tpu.memory_space<vmem>>, vector<8x1xf32>
      %269 = arith.mulf %258, %258 : vector<8x256xf32>
      %cst_117 = arith.constant dense<0.000000e+00> : vector<8xf32>
      %270 = vector.multi_reduction <add>, %269, %cst_117 [1] : vector<8x256xf32> to vector<8xf32>
      %271 = vector.shape_cast %270 : vector<8xf32> to vector<8x1xf32>
      %272 = arith.addf %268, %271 : vector<8x1xf32>
      %c0_118 = arith.constant 0 : index
      %c0_119 = arith.constant 0 : index
      %273 = vector.load %arg10[%c0_118, %c0_119] : memref<8x1xf32, #tpu.memory_space<vmem>>, vector<8x1xf32>
      tpu.vector_store %arg10[%c0_118, %c0_119], %272 {strides = array<i32>} : memref<8x1xf32, #tpu.memory_space<vmem>>, vector<8x1xf32>,
    } else {
    }
    %c1_i32 = arith.constant 1 : i32
    %3 = arith.cmpi eq, %arg0, %c1_i32 : i32
    %4 = arith.extui %3 : i1 to i32
    %c0_i32_1 = arith.constant 0 : i32
    %5 = arith.cmpi ne, %4, %c0_i32_1 : i32
    scf.if %5 {
      %c0 = arith.constant 0 : index
      %c0_2 = arith.constant 0 : index
      %6 = vector.load %arg9[%c0, %c0_2] : memref<8x1xf32, #tpu.memory_space<vmem>>, vector<8x1xf32>
      %cst = arith.constant 0.001953125 : f32
      %7 = vector.broadcast %cst : f32 to vector<8x1xf32>
      %8 = arith.mulf %6, %7 : vector<8x1xf32>
      %c0_3 = arith.constant 0 : index
      %c0_4 = arith.constant 0 : index
      %9 = vector.load %arg10[%c0_3, %c0_4] : memref<8x1xf32, #tpu.memory_space<vmem>>, vector<8x1xf32>
      %cst_5 = arith.constant 0.001953125 : f32
      %10 = vector.broadcast %cst_5 : f32 to vector<8x1xf32>
      %11 = arith.mulf %9, %10 : vector<8x1xf32>
      %12 = arith.mulf %8, %8 : vector<8x1xf32>
      %13 = arith.subf %11, %12 : vector<8x1xf32>
      %cst_6 = arith.constant 0.000000e+00 : f32
      %14 = vector.broadcast %cst_6 : f32 to vector<8x1xf32>
      %15 = arith.maximumf %13, %14 : vector<8x1xf32>
      %c0_7 = arith.constant 0 : index
      %c0_8 = arith.constant 0 : index
      %16 = vector.load %arg4[%c0_7, %c0_8] : memref<8x1xf32, #tpu.memory_space<vmem>>, vector<8x1xf32>
      %cst_9 = arith.constant 9.99999974E-6 : f32
      %17 = vector.broadcast %cst_9 : f32 to vector<8x1xf32>
      %18 = arith.addf %15, %17 : vector<8x1xf32>
      %19 = math.rsqrt %18 : vector<8x1xf32>
      %20 = arith.mulf %16, %19 : vector<8x1xf32>
      %c0_10 = arith.constant 0 : index
      %c0_11 = arith.constant 0 : index
      %21 = vector.load %arg5[%c0_10, %c0_11] : memref<8x1xf32, #tpu.memory_space<vmem>>, vector<8x1xf32>
      %22 = arith.mulf %8, %20 : vector<8x1xf32>
      %23 = arith.subf %21, %22 : vector<8x1xf32>
      %24 = arith.index_cast %arg1 : i32 to index
      %c0_12 = arith.constant 0 : index
      %c0_13 = arith.constant 0 : index
      %25 = vector.load %arg8[%24, %c0_12, %c0_13] : memref<2x8x256xf32, #tpu.memory_space<vmem>>, vector<1x8x256xf32>
      %26 = vector.shape_cast %25 : vector<1x8x256xf32> to vector<8x256xf32>
      %27 = vector.broadcast %20 : vector<8x1xf32> to vector<8x256xf32>
      %28 = arith.mulf %26, %27 : vector<8x256xf32>
      %29 = vector.broadcast %23 : vector<8x1xf32> to vector<8x256xf32>
      %30 = arith.addf %28, %29 : vector<8x256xf32>
      %cst_14 = arith.constant 0.000000e+00 : f32
      %31 = vector.broadcast %cst_14 : f32 to vector<8x256xf32>
      %32 = arith.maximumf %30, %31 : vector<8x256xf32>
      %c0_15 = arith.constant 0 : index
      %c0_16 = arith.constant 0 : index
      %c0_17 = arith.constant 0 : index
      %33 = vector.load %arg6[%c0_15, %c0_16, %c0_17] : memref<1x8x256xf32, #tpu.memory_space<vmem>>, vector<1x8x256xf32>
      %34 = vector.shape_cast %33 : vector<1x8x256xf32> to vector<8x256xf32>
      %35 = arith.addf %32, %34 : vector<8x256xf32>
      %c0_18 = arith.constant 0 : index
      %c0_19 = arith.constant 0 : index
      %c0_20 = arith.constant 0 : index
      %36 = vector.load %arg7[%c0_18, %c0_19, %c0_20] : memref<1x8x256xf32, #tpu.memory_space<vmem>>, vector<1x8x256xf32>
      %37 = vector.shape_cast %36 : vector<1x8x256xf32> to vector<8x256xf32>
      %38 = vector.shape_cast %35 : vector<8x256xf32> to vector<1x8x256xf32>
      tpu.vector_store %arg7[%c0_18, %c0_19, %c0_20], %38 {strides = array<i32>} : memref<1x8x256xf32, #tpu.memory_space<vmem>>, vector<1x8x256xf32>,
    } else {
    }
    return
  }
  func.func @transform_0(%arg0: i32, %arg1: i32) -> (i32, i32, i32) {
    %c0_i32 = arith.constant 0 : i32
    %c0_i32_0 = arith.constant 0 : i32
    %c0_i32_1 = arith.constant 0 : i32
    %c0_i32_2 = arith.constant 0 : i32
    return %c0_i32, %c0_i32_0, %c0_i32_1 : i32, i32, i32
  }
  func.func @transform_1(%arg0: i32, %arg1: i32) -> (i32, i32) {
    %c0_i32 = arith.constant 0 : i32
    %c0_i32_0 = arith.constant 0 : i32
    %c0_i32_1 = arith.constant 0 : i32
    return %c0_i32, %c0_i32_0 : i32, i32
  }
  func.func @transform_2(%arg0: i32, %arg1: i32) -> (i32, i32) {
    %c0_i32 = arith.constant 0 : i32
    %c0_i32_0 = arith.constant 0 : i32
    %c0_i32_1 = arith.constant 0 : i32
    return %c0_i32, %c0_i32_0 : i32, i32
  }
  func.func @transform_3(%arg0: i32, %arg1: i32) -> (i32, i32) {
    %c0_i32 = arith.constant 0 : i32
    %c0_i32_0 = arith.constant 0 : i32
    %c0_i32_1 = arith.constant 0 : i32
    return %c0_i32, %c0_i32_0 : i32, i32
  }
  func.func @transform_4(%arg0: i32, %arg1: i32) -> (i32, i32, i32) {
    %c0_i32 = arith.constant 0 : i32
    %c0_i32_0 = arith.constant 0 : i32
    %c0_i32_1 = arith.constant 0 : i32
    return %arg1, %c0_i32, %c0_i32_0 : i32, i32, i32
  }
  func.func @transform_5(%arg0: i32, %arg1: i32) -> (i32, i32, i32) {
    %0 = arith.muli %arg0, %arg1 : i32
    %c0_i32 = arith.constant 0 : i32
    %c0_i32_0 = arith.constant 0 : i32
    %c0_i32_1 = arith.constant 0 : i32
    return %0, %c0_i32, %c0_i32_0 : i32, i32, i32
  }
}

</mosaic_0001>

<llo_original>
// kernel: global_mixer.1
$region0: #{global_mixer.1}
  #allocation0 [shape = 'u32[]', space=smem, size = 0x4, offset = 0x4, fixed_abs, tag = 'smem constant byte address 0x4 - core index']
  #allocation1 [shape = 'u32[144,128]{1,0:T(1,128)}', space=vmem, size = 0x12000, scoped, tag = 'internal scratch']
  #allocation2 [shape = 'f32[2,8,256]{2,1,0:T(8,128)}', space=vmem, size = 0x4000, scoped, tag = 'scratch operand']
  #allocation3 [shape = 'f32[8,1]{1,0:T(8,128)}', space=vmem, size = 0x1000, scoped, tag = 'scratch operand']
  #allocation4 [shape = 'f32[8,1]{1,0:T(8,128)}', space=vmem, size = 0x1000, scoped, tag = 'scratch operand']
  %s0 = inlined_call_operand.vmem [shape: f32[49,8,256], index: 0, kind: input, shape index: {}]
  %s1 = inlined_call_operand.vmem [shape: f32[8,1], index: 1, kind: input, shape index: {}]
  %s2 = inlined_call_operand.vmem [shape: f32[8,1], index: 2, kind: input, shape index: {}]
  %s3 = inlined_call_operand.vmem [shape: f32[8,1], index: 3, kind: input, shape index: {}]
  %s4 = inlined_call_operand.vmem [shape: f32[2,8,256], index: 4, kind: input, shape index: {}]
  %s5 = inlined_call_operand.vmem [shape: f32[2,8,256], index: 5, kind: output, shape index: {}]
  %s6 = sld [smem:[#allocation0]]
  $region65: #{global_mixer.1} parent=0
    _
  %s8 = ssub.s32 1, %s6
  %s9 = scalar_select 0, %s8, %s6
  loop: start=0, step=1, limit=6
  $region2: #{global_mixer.1} parent=0 // loop_pre_header
    _
  $region3: #{global_mixer.1} parent=0 // loop_header
    %s11 = sphi 0, %s15
    %p12 = scmp.ge.s32.totalorder %s11, 6
    %s18 = sphi 0, %s30
    %s19 = sphi 0, %s26
    %s20 = sphi 0, %s18
    %s21 = sphi 0, %s19
    %s22 = sphi 0, %s20
    %s23 = sphi 0, %s21
    %s31 = sphi 0, %s31
    %s33 = sphi 0, %s31
    %s34 = sphi 0, %s33
    %s48 = sphi 0, %s34
    %s52 = sphi 0, %s52
    %s54 = sphi 0, %s52
    %s55 = sphi 0, %s54
    %s69 = sphi 0, %s55
    %s73 = sphi 0, %s73
    %s75 = sphi 0, %s73
    %s76 = sphi 0, %s75
    %s90 = sphi 0, %s76
    %s94 = sphi 0, %s94
    %s96 = sphi 0, %s94
    %s97 = sphi 0, %s96
    %s111 = sphi 0, %s97
    %s117 = sphi 0, %s119
    %s120 = sphi 0, %s117
    %s121 = sphi 0, %s120
    %s137 = sphi 0, %s121
    %s145 = sphi 0, %s147
    %s148 = sphi 0, %s145
    %s149 = sphi 0, %s148
    %s165 = sphi 0, %s149
  $region4: #{global_mixer.1} parent=0 // loop_header_branch
    %14 = sbr.rel (%p12) target = $region8
  $region5: #{global_mixer.1} parent=0 // loop_body
    %s16 = ssub.s32 %s11, 1
    %s17 = ssub.s32 %s11, 2
    %s24 = sadd.s32 1, %s19
    %p25 = scmp.ge.s32.totalorder %s24, 2
    %s26 = scalar_select %p25, 0, %s24
    %s27 = sadd.s32 1, %s18
    %s28 = scalar_select %p25, %s27, %s18
    %p29 = scmp.ge.s32.totalorder %s28, 2
    %s30 = scalar_select %p29, 0, %s28
    %s32 = sadd.s32 %s31, 1
    %p35 = scmp.eq.s32.totalorder %s11, 3
    %p36 = scmp.ne.s32.totalorder %s31, %s33
    %p37 = scmp.eq.s32.totalorder %s11, 0
    %p38 = por %p36, %p37
    %p39 = scmp.ne.s32.totalorder %s31, %s33
    %p40 = scmp.eq.s32.totalorder %s16, 3
    %p41 = por %p39, %p40
    %p42 = scmp.ne.s32.totalorder %s33, %s34
    %p43 = scmp.eq.s32.totalorder %s16, 0
    %p44 = por %p42, %p43
    %p45 = scmp.ne.s32.totalorder %s33, %s34
    %p46 = scmp.eq.s32.totalorder %s17, 3
    %p47 = por %p45, %p46
    %p49 = scmp.ne.s32.totalorder %s34, %s48
    %p50 = scmp.eq.s32.totalorder %s17, 0
    %p51 = por %p49, %p50
    %s53 = sadd.s32 %s52, 1
    %p56 = scmp.eq.s32.totalorder %s11, 3
    %p57 = scmp.ne.s32.totalorder %s52, %s54
    %p58 = scmp.eq.s32.totalorder %s11, 0
    %p59 = por %p57, %p58
    %p60 = scmp.ne.s32.totalorder %s52, %s54
    %p61 = scmp.eq.s32.totalorder %s16, 3
    %p62 = por %p60, %p61
    %p63 = scmp.ne.s32.totalorder %s54, %s55
    %p64 = scmp.eq.s32.totalorder %s16, 0
    %p65 = por %p63, %p64
    %p66 = scmp.ne.s32.totalorder %s54, %s55
    %p67 = scmp.eq.s32.totalorder %s17, 3
    %p68 = por %p66, %p67
    %p70 = scmp.ne.s32.totalorder %s55, %s69
    %p71 = scmp.eq.s32.totalorder %s17, 0
    %p72 = por %p70, %p71
    %s74 = sadd.s32 %s73, 1
    %p77 = scmp.eq.s32.totalorder %s11, 3
    %p78 = scmp.ne.s32.totalorder %s73, %s75
    %p79 = scmp.eq.s32.totalorder %s11, 0
    %p80 = por %p78, %p79
    %p81 = scmp.ne.s32.totalorder %s73, %s75
    %p82 = scmp.eq.s32.totalorder %s16, 3
    %p83 = por %p81, %p82
    %p84 = scmp.ne.s32.totalorder %s75, %s76
    %p85 = scmp.eq.s32.totalorder %s16, 0
    %p86 = por %p84, %p85
    %p87 = scmp.ne.s32.totalorder %s75, %s76
    %p88 = scmp.eq.s32.totalorder %s17, 3
    %p89 = por %p87, %p88
    %p91 = scmp.ne.s32.totalorder %s76, %s90
    %p92 = scmp.eq.s32.totalorder %s17, 0
    %p93 = por %p91, %p92
    %s95 = sadd.s32 %s94, 1
    %p98 = scmp.eq.s32.totalorder %s11, 3
    %p99 = scmp.ne.s32.totalorder %s94, %s96
    %p100 = scmp.eq.s32.totalorder %s11, 0
    %p101 = por %p99, %p100
    %p102 = scmp.ne.s32.totalorder %s94, %s96
    %p103 = scmp.eq.s32.totalorder %s16, 3
    %p104 = por %p102, %p103
    %p105 = scmp.ne.s32.totalorder %s96, %s97
    %p106 = scmp.eq.s32.totalorder %s16, 0
    %p107 = por %p105, %p106
    %p108 = scmp.ne.s32.totalorder %s96, %s97
    %p109 = scmp.eq.s32.totalorder %s17, 3
    %p110 = por %p108, %p109
    %p112 = scmp.ne.s32.totalorder %s97, %s111
    %p113 = scmp.eq.s32.totalorder %s17, 0
    %p114 = por %p112, %p113
    %s115 = ssub.s32 %s19, %s26
    %p116 = scmp.eq.s32.totalorder %s115, 0
    %s118 = sadd.s32 %s117, 1
    %s119 = scalar_select %p116, %s117, %s118
    %p122 = pneg %p116
    %p123 = scmp.eq.s32.totalorder %s11, 3
    %p124 = por %p122, %p123
    %p125 = scmp.ne.s32.totalorder %s117, %s120
    %p126 = scmp.eq.s32.totalorder %s11, 0
    %p127 = por %p125, %p126
    %p128 = scmp.ne.s32.totalorder %s117, %s120
    %p129 = scmp.eq.s32.totalorder %s16, 3
    %p130 = por %p128, %p129
    %p131 = scmp.ne.s32.totalorder %s120, %s121
    %p132 = scmp.eq.s32.totalorder %s16, 0
    %p133 = por %p131, %p132
    %p134 = scmp.ne.s32.totalorder %s120, %s121
    %p135 = scmp.eq.s32.totalorder %s17, 3
    %p136 = por %p134, %p135
    %p138 = scmp.ne.s32.totalorder %s121, %s137
    %p139 = scmp.eq.s32.totalorder %s17, 0
    %p140 = por %p138, %p139
    %s141 = smul.u32 %s18, %s19
    %s142 = smul.u32 %s30, %s26
    %s143 = ssub.s32 %s141, %s142
    %p144 = scmp.eq.s32.totalorder %s143, 0
    %s146 = sadd.s32 %s145, 1
    %s147 = scalar_select %p144, %s145, %s146
    %p150 = pneg %p144
    %p151 = scmp.eq.s32.totalorder %s11, 3
    %p152 = por %p150, %p151
    %p153 = scmp.ne.s32.totalorder %s145, %s148
    %p154 = scmp.eq.s32.totalorder %s11, 0
    %p155 = por %p153, %p154
    %p156 = scmp.ne.s32.totalorder %s145, %s148
    %p157 = scmp.eq.s32.totalorder %s16, 3
    %p158 = por %p156, %p157
    %p159 = scmp.ne.s32.totalorder %s148, %s149
    %p160 = scmp.eq.s32.totalorder %s16, 0
    %p161 = por %p159, %p160
    %p162 = scmp.ne.s32.totalorder %s148, %s149
    %p163 = scmp.eq.s32.totalorder %s17, 3
    %p164 = por %p162, %p163
    %p166 = scmp.ne.s32.totalorder %s149, %s165
    %p167 = scmp.eq.s32.totalorder %s17, 0
    %p168 = por %p166, %p167
    %p169 = scmp.le.s32.totalorder 1, %s11
    %p170 = scmp.lt.s32.totalorder %s11, 5
    %p171 = pnand %p169, %p170
    %p172 = pneg %p171
    // Predicated region
    $region9: #{global_mixer.1} parent=5 // pred_check
      _
    $region10: #{global_mixer.1} parent=5 // pred_check_branch
      %174 = sbr.rel (%p171) target = $region12
    $region11: #{global_mixer.1} parent=5 // pred_region
      %s175 = ssub.s32 %s11, 1
      // Predicated region
      $region13: #{global_mixer.1} parent=11 // pred_check
        %p176 = pneg %p44
      $region14: #{global_mixer.1} parent=11 // pred_check_branch
        %178 = sbr.rel (%p176) target = $region16
      $region15: #{global_mixer.1} parent=11 // pred_region
        _
      $region16: #{global_mixer.1} parent=11 // pred_fallthru
        _
      // Predicated region
      $region17: #{global_mixer.1} parent=11 // pred_check
        %p179 = pneg %p65
      $region18: #{global_mixer.1} parent=11 // pred_check_branch
        %181 = sbr.rel (%p179) target = $region20
      $region19: #{global_mixer.1} parent=11 // pred_region
        _
      $region20: #{global_mixer.1} parent=11 // pred_fallthru
        _
      // Predicated region
      $region21: #{global_mixer.1} parent=11 // pred_check
        %p182 = pneg %p86
      $region22: #{global_mixer.1} parent=11 // pred_check_branch
        %184 = sbr.rel (%p182) target = $region24
      $region23: #{global_mixer.1} parent=11 // pred_region
        _
      $region24: #{global_mixer.1} parent=11 // pred_fallthru
        _
      // Predicated region
      $region25: #{global_mixer.1} parent=11 // pred_check
        %p185 = pneg %p107
      $region26: #{global_mixer.1} parent=11 // pred_check_branch
        %187 = sbr.rel (%p185) target = $region28
      $region27: #{global_mixer.1} parent=11 // pred_region
        _
      $region28: #{global_mixer.1} parent=11 // pred_fallthru
        _
    $region12: #{global_mixer.1} parent=5 // pred_fallthru
      _
    %p188 = scmp.lt.s32.totalorder %s11, 4
    // Predicated region
    $region29: #{global_mixer.1} parent=5 // pred_check
      %p189 = pneg %p188
    $region30: #{global_mixer.1} parent=5 // pred_check_branch
      %191 = sbr.rel (%p189) target = $region32
    $region31: #{global_mixer.1} parent=5 // pred_region
      // Predicated region
      $region33: #{global_mixer.1} parent=31 // pred_check
        %p192 = pneg %p127
      $region34: #{global_mixer.1} parent=31 // pred_check_branch
        %194 = sbr.rel (%p192) target = $region36
      $region35: #{global_mixer.1} parent=31 // pred_region
        %p195 = scmp.lt.s32.totalorder %s19, 1
        %s196 = scalar_select %p195, %s19, 1
        %s197 = smul.addr %s196, 2
        %s198 = smul.addr %s197, 8
        %s199 = scalar_lea.vmem %s4, %s198
      $region36: #{global_mixer.1} parent=31 // pred_fallthru
        _
    $region32: #{global_mixer.1} parent=5 // pred_fallthru
      _
    %p200 = scmp.le.s32.totalorder 1, %s11
    %p201 = scmp.lt.s32.totalorder %s11, 5
    %p202 = pnand %p200, %p201
    %p203 = pneg %p202
    // Predicated region
    $region37: #{global_mixer.1} parent=5 // pred_check
      _
    $region38: #{global_mixer.1} parent=5 // pred_check_branch
      %205 = sbr.rel (%p202) target = $region40
    $region39: #{global_mixer.1} parent=5 // pred_region
      %s206 = ssub.s32 %s11, 1
      %p207 = pneg %p44
      %p208 = pneg %p41
      %p209 = pneg %p65
      %p210 = pneg %p62
      %p211 = pneg %p86
      %p212 = pneg %p83
      %p213 = pneg %p107
      %p214 = pneg %p104
      %p215 = scmp.lt.s32.totalorder %s21, 1
      %s216 = scalar_select %p215, %s21, 1
      %s217 = smul.addr %s216, 2
      %s218 = smul.addr %s217, 8
      %s219 = scalar_lea.vmem %s4, %s218
      %p220 = pneg %p133
      %p221 = pneg %p130
      %p222 = pneg %p161
      %p223 = pneg %p158
      %s224 = smul.u32 %s20, %s21
      %p225 = scmp.lt.s32.totalorder %s224, 1
      %s226 = scalar_select %p225, %s224, 1
      %s227 = smul.addr %s226, 2
      %s228 = smul.addr %s227, 8
      %s229 = scalar_lea.vmem %s5, %s228
      %p230 = scmp.lt.s32.totalorder %s21, 1
      %s231 = scalar_select %p230, %s21, 1
      %s232 = smul.addr %s231, 2
      %s233 = smul.addr %s232, 8
      %s234 = scalar_lea.vmem %s4, %s233
      %s235 = smul.u32 %s20, %s21
      %p236 = scmp.lt.s32.totalorder %s235, 1
      %s237 = scalar_select %p236, %s235, 1
      %s238 = smul.addr %s237, 2
      %s239 = smul.addr %s238, 8
      %s240 = scalar_lea.vmem %s5, %s239
      %s241 = smul.u32 %s20, %s21
      %p242 = scmp.eq.s32.totalorder %s20, 0
      // Predicated region
      $region41: #{global_mixer.1} parent=39 // pred_check
        %p243 = pneg %p242
      $region42: #{global_mixer.1} parent=39 // pred_check_branch
        %245 = sbr.rel (%p243) target = $region44
      $region43: #{global_mixer.1} parent=39 // pred_region
        %p246 = scmp.eq.s32.totalorder %s21, 0
        // Predicated region
        $region45: #{global_mixer.1} parent=43 // pred_check
          %p247 = pneg %p246
        $region46: #{global_mixer.1} parent=43 // pred_check_branch
          %249 = sbr.rel (%p247) target = $region48
        $region47: #{global_mixer.1} parent=43 // pred_region
          %vm250 = vcmask 7168
          %251 = vst.msk [vmem:[#allocation3] sm:$0xff] %vm250, 0.0
          %252 = vst.msk [vmem:[#allocation4] sm:$0xff] %vm250, 0.0
        $region48: #{global_mixer.1} parent=43 // pred_fallthru
          _
        %v253 = vld [vmem:[%s234] sm:$0xff]
        %v254 = vld [vmem:[%s234 + $0x8] sm:$0xff]
        %v255 = vld [vmem:[%s1] sm:$0xff]
        %256 = vrot.lane.b32.xlu0 %v253, 51
        %v257 = vpop.permute.xlu0 %256
        %258 = vrot.lane.b32.xlu0 %v254, 51
        %v259 = vpop.permute.xlu0 %258
        %v260 = vlaneseq
        %v261 = vand.u32 %v260, 127
        %vm262 = vcmp.lt.s32.totalorder %v261, 51
        %v263 = vsel %vm262, %v257, %v259
        %v264 = vsel %vm262, %v259, %v257
        %v265 = vld [vmem:[%s0] sm:$0xff]
        %v266 = vld [vmem:[%s0 + $0x8] sm:$0xff]
        %v267 = vmul.f32 %v264, %v265
        %v268 = vmul.f32 %v263, %v266
        %v269 = vadd.f32 %v267, 0.0
        %v270 = vadd.f32 %v268, 0.0
        %271 = vrot.lane.b32.xlu0 %v253, 50
        %v272 = vpop.permute.xlu0 %271
        %273 = vrot.lane.b32.xlu0 %v254, 50
        %v274 = vpop.permute.xlu0 %273
        %vm275 = vcmp.lt.s32.totalorder %v261, 50
        %v276 = vsel %vm275, %v272, %v274
        %v277 = vsel %vm275, %v274, %v272
        %s278 = scalar_lea.vmem %s0, 16
        %v279 = vld [vmem:[%s278] sm:$0xff]
        %v280 = vld [vmem:[%s278 + $0x8] sm:$0xff]
        %v281 = vmul.f32 %v277, %v279
        %v282 = vmul.f32 %v276, %v280
        %v283 = vadd.f32 %v269, %v281
        %v284 = vadd.f32 %v270, %v282
        %285 = vrot.lane.b32.xlu0 %v253, 49
        %v286 = vpop.permute.xlu0 %285
        %287 = vrot.lane.b32.xlu0 %v254, 49
        %v288 = vpop.permute.xlu0 %287
        %vm289 = vcmp.lt.s32.totalorder %v261, 49
        %v290 = vsel %vm289, %v286, %v288
        %v291 = vsel %vm289, %v288, %v286
        %s292 = scalar_lea.vmem %s0, 32
        %v293 = vld [vmem:[%s292] sm:$0xff]
        %v294 = vld [vmem:[%s292 + $0x8] sm:$0xff]
        %v295 = vmul.f32 %v291, %v293
        %v296 = vmul.f32 %v290, %v294
        %v297 = vadd.f32 %v283, %v295
        %v298 = vadd.f32 %v284, %v296
        %299 = vrot.lane.b32.xlu0 %v253, 48
        %v300 = vpop.permute.xlu0 %299
        %301 = vrot.lane.b32.xlu0 %v254, 48
        %v302 = vpop.permute.xlu0 %301
        %vm303 = vcmp.lt.s32.totalorder %v261, 48
        %v304 = vsel %vm303, %v300, %v302
        %v305 = vsel %vm303, %v302, %v300
        %s306 = scalar_lea.vmem %s0, 48
        %v307 = vld [vmem:[%s306] sm:$0xff]
        %v308 = vld [vmem:[%s306 + $0x8] sm:$0xff]
        %v309 = vmul.f32 %v305, %v307
        %v310 = vmul.f32 %v304, %v308
        %v311 = vadd.f32 %v297, %v309
        %v312 = vadd.f32 %v298, %v310
        %313 = vrot.lane.b32.xlu0 %v253, 47
        %v314 = vpop.permute.xlu0 %313
        %315 = vrot.lane.b32.xlu0 %v254, 47
        %v316 = vpop.permute.xlu0 %315
        %vm317 = vcmp.lt.s32.totalorder %v261, 47
        %v318 = vsel %vm317, %v314, %v316
        %v319 = vsel %vm317, %v316, %v314
        %s320 = scalar_lea.vmem %s0, 64
        %v321 = vld [vmem:[%s320] sm:$0xff]
        %v322 = vld [vmem:[%s320 + $0x8] sm:$0xff]
        %v323 = vmul.f32 %v319, %v321
        %v324 = vmul.f32 %v318, %v322
        %v325 = vadd.f32 %v311, %v323
        %v326 = vadd.f32 %v312, %v324
        %327 = vrot.lane.b32.xlu0 %v253, 46
        %v328 = vpop.permute.xlu0 %327
        %329 = vrot.lane.b32.xlu0 %v254, 46
        %v330 = vpop.permute.xlu0 %329
        %vm331 = vcmp.lt.s32.totalorder %v261, 46
        %v332 = vsel %vm331, %v328, %v330
        %v333 = vsel %vm331, %v330, %v328
        %s334 = scalar_lea.vmem %s0, 80
        %v335 = vld [vmem:[%s334] sm:$0xff]
        %v336 = vld [vmem:[%s334 + $0x8] sm:$0xff]
        %v337 = vmul.f32 %v333, %v335
        %v338 = vmul.f32 %v332, %v336
        %v339 = vadd.f32 %v325, %v337
        %v340 = vadd.f32 %v326, %v338
        %341 = vrot.lane.b32.xlu0 %v253, 45
        %v342 = vpop.permute.xlu0 %341
        %343 = vrot.lane.b32.xlu0 %v254, 45
        %v344 = vpop.permute.xlu0 %343
        %vm345 = vcmp.lt.s32.totalorder %v261, 45
        %v346 = vsel %vm345, %v342, %v344
        %v347 = vsel %vm345, %v344, %v342
        %s348 = scalar_lea.vmem %s0, 96
        %v349 = vld [vmem:[%s348] sm:$0xff]
        %v350 = vld [vmem:[%s348 + $0x8] sm:$0xff]
        %v351 = vmul.f32 %v347, %v349
        %v352 = vmul.f32 %v346, %v350
        %v353 = vadd.f32 %v339, %v351
        %v354 = vadd.f32 %v340, %v352
        %355 = vrot.lane.b32.xlu0 %v253, 35
        %v356 = vpop.permute.xlu0 %355
        %357 = vrot.lane.b32.xlu0 %v254, 35
        %v358 = vpop.permute.xlu0 %357
        %vm359 = vcmp.lt.s32.totalorder %v261, 35
        %v360 = vsel %vm359, %v356, %v358
        %v361 = vsel %vm359, %v358, %v356
        %s362 = scalar_lea.vmem %s0, 112
        %v363 = vld [vmem:[%s362] sm:$0xff]
        %v364 = vld [vmem:[%s362 + $0x8] sm:$0xff]
        %v365 = vmul.f32 %v361, %v363
        %v366 = vmul.f32 %v360, %v364
        %v367 = vadd.f32 %v353, %v365
        %v368 = vadd.f32 %v354, %v366
        %369 = vrot.lane.b32.xlu0 %v253, 34
        %v370 = vpop.permute.xlu0 %369
        %371 = vrot.lane.b32.xlu0 %v254, 34
        %v372 = vpop.permute.xlu0 %371
        %vm373 = vcmp.lt.s32.totalorder %v261, 34
        %v374 = vsel %vm373, %v370, %v372
        %v375 = vsel %vm373, %v372, %v370
        %s376 = scalar_lea.vmem %s0, 128
        %v377 = vld [vmem:[%s376] sm:$0xff]
        %v378 = vld [vmem:[%s376 + $0x8] sm:$0xff]
        %v379 = vmul.f32 %v375, %v377
        %v380 = vmul.f32 %v374, %v378
        %v381 = vadd.f32 %v367, %v379
        %v382 = vadd.f32 %v368, %v380
        %383 = vrot.lane.b32.xlu0 %v253, 33
        %v384 = vpop.permute.xlu0 %383
        %385 = vrot.lane.b32.xlu0 %v254, 33
        %v386 = vpop.permute.xlu0 %385
        %vm387 = vcmp.lt.s32.totalorder %v261, 33
        %v388 = vsel %vm387, %v384, %v386
        %v389 = vsel %vm387, %v386, %v384
        %s390 = scalar_lea.vmem %s0, 144
        %v391 = vld [vmem:[%s390] sm:$0xff]
        %v392 = vld [vmem:[%s390 + $0x8] sm:$0xff]
        %v393 = vmul.f32 %v389, %v391
        %v394 = vmul.f32 %v388, %v392
        %v395 = vadd.f32 %v381, %v393
        %v396 = vadd.f32 %v382, %v394
        %397 = vrot.lane.b32.xlu0 %v253, 32
        %v398 = vpop.permute.xlu0 %397
        %399 = vrot.lane.b32.xlu0 %v254, 32
        %v400 = vpop.permute.xlu0 %399
        %vm401 = vcmp.lt.s32.totalorder %v261, 32
        %v402 = vsel %vm401, %v398, %v400
        %v403 = vsel %vm401, %v400, %v398
        %s404 = scalar_lea.vmem %s0, 160
        %v405 = vld [vmem:[%s404] sm:$0xff]
        %v406 = vld [vmem:[%s404 + $0x8] sm:$0xff]
        %v407 = vmul.f32 %v403, %v405
        %v408 = vmul.f32 %v402, %v406
        %v409 = vadd.f32 %v395, %v407
        %v410 = vadd.f32 %v396, %v408
        %411 = vrot.lane.b32.xlu0 %v253, 31
        %v412 = vpop.permute.xlu0 %411
        %413 = vrot.lane.b32.xlu0 %v254, 31
        %v414 = vpop.permute.xlu0 %413
        %vm415 = vcmp.lt.s32.totalorder %v261, 31
        %v416 = vsel %vm415, %v412, %v414
        %v417 = vsel %vm415, %v414, %v412
        %s418 = scalar_lea.vmem %s0, 176
        %v419 = vld [vmem:[%s418] sm:$0xff]
        %v420 = vld [vmem:[%s418 + $0x8] sm:$0xff]
        %v421 = vmul.f32 %v417, %v419
        %v422 = vmul.f32 %v416, %v420
        %v423 = vadd.f32 %v409, %v421
        %v424 = vadd.f32 %v410, %v422
        %425 = vrot.lane.b32.xlu0 %v253, 30
        %v426 = vpop.permute.xlu0 %425
        %427 = vrot.lane.b32.xlu0 %v254, 30
        %v428 = vpop.permute.xlu0 %427
        %vm429 = vcmp.lt.s32.totalorder %v261, 30
        %v430 = vsel %vm429, %v426, %v428
        %v431 = vsel %vm429, %v428, %v426
        %s432 = scalar_lea.vmem %s0, 192
        %v433 = vld [vmem:[%s432] sm:$0xff]
        %v434 = vld [vmem:[%s432 + $0x8] sm:$0xff]
        %v435 = vmul.f32 %v431, %v433
        %v436 = vmul.f32 %v430, %v434
        %v437 = vadd.f32 %v423, %v435
        %v438 = vadd.f32 %v424, %v436
        %439 = vrot.lane.b32.xlu0 %v253, 29
        %v440 = vpop.permute.xlu0 %439
        %441 = vrot.lane.b32.xlu0 %v254, 29
        %v442 = vpop.permute.xlu0 %441
        %vm443 = vcmp.lt.s32.totalorder %v261, 29
        %v444 = vsel %vm443, %v440, %v442
        %v445 = vsel %vm443, %v442, %v440
        %s446 = scalar_lea.vmem %s0, 208
        %v447 = vld [vmem:[%s446] sm:$0xff]
        %v448 = vld [vmem:[%s446 + $0x8] sm:$0xff]
        %v449 = vmul.f32 %v445, %v447
        %v450 = vmul.f32 %v444, %v448
        %v451 = vadd.f32 %v437, %v449
        %v452 = vadd.f32 %v438, %v450
        %453 = vrot.lane.b32.xlu0 %v253, 19
        %v454 = vpop.permute.xlu0 %453
        %455 = vrot.lane.b32.xlu0 %v254, 19
        %v456 = vpop.permute.xlu0 %455
        %vm457 = vcmp.lt.s32.totalorder %v261, 19
        %v458 = vsel %vm457, %v454, %v456
        %v459 = vsel %vm457, %v456, %v454
        %s460 = scalar_lea.vmem %s0, 224
        %v461 = vld [vmem:[%s460] sm:$0xff]
        %v462 = vld [vmem:[%s460 + $0x8] sm:$0xff]
        %v463 = vmul.f32 %v459, %v461
        %v464 = vmul.f32 %v458, %v462
        %v465 = vadd.f32 %v451, %v463
        %v466 = vadd.f32 %v452, %v464
        %467 = vrot.lane.b32.xlu0 %v253, 18
        %v468 = vpop.permute.xlu0 %467
        %469 = vrot.lane.b32.xlu0 %v254, 18
        %v470 = vpop.permute.xlu0 %469
        %vm471 = vcmp.lt.s32.totalorder %v261, 18
        %v472 = vsel %vm471, %v468, %v470
        %v473 = vsel %vm471, %v470, %v468
        %s474 = scalar_lea.vmem %s0, 240
        %v475 = vld [vmem:[%s474] sm:$0xff]
        %v476 = vld [vmem:[%s474 + $0x8] sm:$0xff]
        %v477 = vmul.f32 %v473, %v475
        %v478 = vmul.f32 %v472, %v476
        %v479 = vadd.f32 %v465, %v477
        %v480 = vadd.f32 %v466, %v478
        %481 = vrot.lane.b32.xlu0 %v253, 17
        %v482 = vpop.permute.xlu0 %481
        %483 = vrot.lane.b32.xlu0 %v254, 17
        %v484 = vpop.permute.xlu0 %483
        %vm485 = vcmp.lt.s32.totalorder %v261, 17
        %v486 = vsel %vm485, %v482, %v484
        %v487 = vsel %vm485, %v484, %v482
        %s488 = scalar_lea.vmem %s0, 256
        %v489 = vld [vmem:[%s488] sm:$0xff]
        %v490 = vld [vmem:[%s488 + $0x8] sm:$0xff]
        %v491 = vmul.f32 %v487, %v489
        %v492 = vmul.f32 %v486, %v490
        %v493 = vadd.f32 %v479, %v491
        %v494 = vadd.f32 %v480, %v492
        %495 = vrot.lane.b32.xlu0 %v253, 16
        %v496 = vpop.permute.xlu0 %495
        %497 = vrot.lane.b32.xlu0 %v254, 16
        %v498 = vpop.permute.xlu0 %497
        %vm499 = vcmp.lt.s32.totalorder %v261, 16
        %v500 = vsel %vm499, %v496, %v498
        %v501 = vsel %vm499, %v498, %v496
        %s502 = scalar_lea.vmem %s0, 272
        %v503 = vld [vmem:[%s502] sm:$0xff]
        %v504 = vld [vmem:[%s502 + $0x8] sm:$0xff]
        %v505 = vmul.f32 %v501, %v503
        %v506 = vmul.f32 %v500, %v504
        %v507 = vadd.f32 %v493, %v505
        %v508 = vadd.f32 %v494, %v506
        %509 = vrot.lane.b32.xlu0 %v253, 15
        %v510 = vpop.permute.xlu0 %509
        %511 = vrot.lane.b32.xlu0 %v254, 15
        %v512 = vpop.permute.xlu0 %511
        %vm513 = vcmp.lt.s32.totalorder %v261, 15
        %v514 = vsel %vm513, %v510, %v512
        %v515 = vsel %vm513, %v512, %v510
        %s516 = scalar_lea.vmem %s0, 288
        %v517 = vld [vmem:[%s516] sm:$0xff]
        %v518 = vld [vmem:[%s516 + $0x8] sm:$0xff]
        %v519 = vmul.f32 %v515, %v517
        %v520 = vmul.f32 %v514, %v518
        %v521 = vadd.f32 %v507, %v519
        %v522 = vadd.f32 %v508, %v520
        %523 = vrot.lane.b32.xlu0 %v253, 14
        %v524 = vpop.permute.xlu0 %523
        %525 = vrot.lane.b32.xlu0 %v254, 14
        %v526 = vpop.permute.xlu0 %525
        %vm527 = vcmp.lt.s32.totalorder %v261, 14
        %v528 = vsel %vm527, %v524, %v526
        %v529 = vsel %vm527, %v526, %v524
        %s530 = scalar_lea.vmem %s0, 304
        %v531 = vld [vmem:[%s530] sm:$0xff]
        %v532 = vld [vmem:[%s530 + $0x8] sm:$0xff]
        %v533 = vmul.f32 %v529, %v531
        %v534 = vmul.f32 %v528, %v532
        %v535 = vadd.f32 %v521, %v533
        %v536 = vadd.f32 %v522, %v534
        %537 = vrot.lane.b32.xlu0 %v253, 13
        %v538 = vpop.permute.xlu0 %537
        %539 = vrot.lane.b32.xlu0 %v254, 13
        %v540 = vpop.permute.xlu0 %539
        %vm541 = vcmp.lt.s32.totalorder %v261, 13
        %v542 = vsel %vm541, %v538, %v540
        %v543 = vsel %vm541, %v540, %v538
        %s544 = scalar_lea.vmem %s0, 320
        %v545 = vld [vmem:[%s544] sm:$0xff]
        %v546 = vld [vmem:[%s544 + $0x8] sm:$0xff]
        %v547 = vmul.f32 %v543, %v545
        %v548 = vmul.f32 %v542, %v546
        %v549 = vadd.f32 %v535, %v547
        %v550 = vadd.f32 %v536, %v548
        %551 = vrot.lane.b32.xlu0 %v253, 3
        %v552 = vpop.permute.xlu0 %551
        %553 = vrot.lane.b32.xlu0 %v254, 3
        %v554 = vpop.permute.xlu0 %553
        %vm555 = vcmp.lt.s32.totalorder %v261, 3
        %v556 = vsel %vm555, %v552, %v554
        %v557 = vsel %vm555, %v554, %v552
        %s558 = scalar_lea.vmem %s0, 336
        %v559 = vld [vmem:[%s558] sm:$0xff]
        %v560 = vld [vmem:[%s558 + $0x8] sm:$0xff]
        %v561 = vmul.f32 %v557, %v559
        %v562 = vmul.f32 %v556, %v560
        %v563 = vadd.f32 %v549, %v561
        %v564 = vadd.f32 %v550, %v562
        %565 = vrot.lane.b32.xlu0 %v253, 2
        %v566 = vpop.permute.xlu0 %565
        %567 = vrot.lane.b32.xlu0 %v254, 2
        %v568 = vpop.permute.xlu0 %567
        %vm569 = vcmp.lt.s32.totalorder %v261, 2
        %v570 = vsel %vm569, %v566, %v568
        %v571 = vsel %vm569, %v568, %v566
        %s572 = scalar_lea.vmem %s0, 352
        %v573 = vld [vmem:[%s572] sm:$0xff]
        %v574 = vld [vmem:[%s572 + $0x8] sm:$0xff]
        %v575 = vmul.f32 %v571, %v573
        %v576 = vmul.f32 %v570, %v574
        %v577 = vadd.f32 %v563, %v575
        %v578 = vadd.f32 %v564, %v576
        %579 = vrot.lane.b32.xlu0 %v253, 1
        %v580 = vpop.permute.xlu0 %579
        %581 = vrot.lane.b32.xlu0 %v254, 1
        %v582 = vpop.permute.xlu0 %581
        %vm583 = vcmp.lt.s32.totalorder %v261, 1
        %v584 = vsel %vm583, %v580, %v582
        %v585 = vsel %vm583, %v582, %v580
        %s586 = scalar_lea.vmem %s0, 368
        %v587 = vld [vmem:[%s586] sm:$0xff]
        %v588 = vld [vmem:[%s586 + $0x8] sm:$0xff]
        %v589 = vmul.f32 %v585, %v587
        %v590 = vmul.f32 %v584, %v588
        %v591 = vadd.f32 %v577, %v589
        %v592 = vadd.f32 %v578, %v590
        %s593 = scalar_lea.vmem %s0, 384
        %v594 = vld [vmem:[%s593] sm:$0xff]
        %v595 = vld [vmem:[%s593 + $0x8] sm:$0xff]
        %v596 = vmul.f32 %v253, %v594
        %v597 = vmul.f32 %v254, %v595
        %v598 = vadd.f32 %v591, %v596
        %v599 = vadd.f32 %v592, %v597
        %600 = vrot.lane.b32.xlu0 %v253, 127
        %v601 = vpop.permute.xlu0 %600
        %602 = vrot.lane.b32.xlu0 %v254, 127
        %v603 = vpop.permute.xlu0 %602
        %vm604 = vcmp.lt.s32.totalorder %v261, 127
        %v605 = vsel %vm604, %v601, %v603
        %v606 = vsel %vm604, %v603, %v601
        %s607 = scalar_lea.vmem %s0, 400
        %v608 = vld [vmem:[%s607] sm:$0xff]
        %v609 = vld [vmem:[%s607 + $0x8] sm:$0xff]
        %v610 = vmul.f32 %v605, %v608
        %v611 = vmul.f32 %v606, %v609
        %v612 = vadd.f32 %v598, %v610
        %v613 = vadd.f32 %v599, %v611
        %614 = vrot.lane.b32.xlu0 %v253, 126
        %v615 = vpop.permute.xlu0 %614
        %616 = vrot.lane.b32.xlu0 %v254, 126
        %v617 = vpop.permute.xlu0 %616
        %vm618 = vcmp.lt.s32.totalorder %v261, 126
        %v619 = vsel %vm618, %v615, %v617
        %v620 = vsel %vm618, %v617, %v615
        %s621 = scalar_lea.vmem %s0, 416
        %v622 = vld [vmem:[%s621] sm:$0xff]
        %v623 = vld [vmem:[%s621 + $0x8] sm:$0xff]
        %v624 = vmul.f32 %v619, %v622
        %v625 = vmul.f32 %v620, %v623
        %v626 = vadd.f32 %v612, %v624
        %v627 = vadd.f32 %v613, %v625
        %628 = vrot.lane.b32.xlu0 %v253, 125
        %v629 = vpop.permute.xlu0 %628
        %630 = vrot.lane.b32.xlu0 %v254, 125
        %v631 = vpop.permute.xlu0 %630
        %vm632 = vcmp.lt.s32.totalorder %v261, 125
        %v633 = vsel %vm632, %v629, %v631
        %v634 = vsel %vm632, %v631, %v629
        %s635 = scalar_lea.vmem %s0, 432
        %v636 = vld [vmem:[%s635] sm:$0xff]
        %v637 = vld [vmem:[%s635 + $0x8] sm:$0xff]
        %v638 = vmul.f32 %v633, %v636
        %v639 = vmul.f32 %v634, %v637
        %v640 = vadd.f32 %v626, %v638
        %v641 = vadd.f32 %v627, %v639
        %642 = vrot.lane.b32.xlu0 %v253, 115
        %v643 = vpop.permute.xlu0 %642
        %644 = vrot.lane.b32.xlu0 %v254, 115
        %v645 = vpop.permute.xlu0 %644
        %vm646 = vcmp.lt.s32.totalorder %v261, 115
        %v647 = vsel %vm646, %v643, %v645
        %v648 = vsel %vm646, %v645, %v643
        %s649 = scalar_lea.vmem %s0, 448
        %v650 = vld [vmem:[%s649] sm:$0xff]
        %v651 = vld [vmem:[%s649 + $0x8] sm:$0xff]
        %v652 = vmul.f32 %v647, %v650
        %v653 = vmul.f32 %v648, %v651
        %v654 = vadd.f32 %v640, %v652
        %v655 = vadd.f32 %v641, %v653
        %656 = vrot.lane.b32.xlu0 %v253, 114
        %v657 = vpop.permute.xlu0 %656
        %658 = vrot.lane.b32.xlu0 %v254, 114
        %v659 = vpop.permute.xlu0 %658
        %vm660 = vcmp.lt.s32.totalorder %v261, 114
        %v661 = vsel %vm660, %v657, %v659
        %v662 = vsel %vm660, %v659, %v657
        %s663 = scalar_lea.vmem %s0, 464
        %v664 = vld [vmem:[%s663] sm:$0xff]
        %v665 = vld [vmem:[%s663 + $0x8] sm:$0xff]
        %v666 = vmul.f32 %v661, %v664
        %v667 = vmul.f32 %v662, %v665
        %v668 = vadd.f32 %v654, %v666
        %v669 = vadd.f32 %v655, %v667
        %670 = vrot.lane.b32.xlu0 %v253, 113
        %v671 = vpop.permute.xlu0 %670
        %672 = vrot.lane.b32.xlu0 %v254, 113
        %v673 = vpop.permute.xlu0 %672
        %vm674 = vcmp.lt.s32.totalorder %v261, 113
        %v675 = vsel %vm674, %v671, %v673
        %v676 = vsel %vm674, %v673, %v671
        %s677 = scalar_lea.vmem %s0, 480
        %v678 = vld [vmem:[%s677] sm:$0xff]
        %v679 = vld [vmem:[%s677 + $0x8] sm:$0xff]
        %v680 = vmul.f32 %v675, %v678
        %v681 = vmul.f32 %v676, %v679
        %v682 = vadd.f32 %v668, %v680
        %v683 = vadd.f32 %v669, %v681
        %684 = vrot.lane.b32.xlu0 %v253, 112
        %v685 = vpop.permute.xlu0 %684
        %686 = vrot.lane.b32.xlu0 %v254, 112
        %v687 = vpop.permute.xlu0 %686
        %vm688 = vcmp.lt.s32.totalorder %v261, 112
        %v689 = vsel %vm688, %v685, %v687
        %v690 = vsel %vm688, %v687, %v685
        %s691 = scalar_lea.vmem %s0, 496
        %v692 = vld [vmem:[%s691] sm:$0xff]
        %v693 = vld [vmem:[%s691 + $0x8] sm:$0xff]
        %v694 = vmul.f32 %v689, %v692
        %v695 = vmul.f32 %v690, %v693
        %v696 = vadd.f32 %v682, %v694
        %v697 = vadd.f32 %v683, %v695
        %698 = vrot.lane.b32.xlu0 %v253, 111
        %v699 = vpop.permute.xlu0 %698
        %700 = vrot.lane.b32.xlu0 %v254, 111
        %v701 = vpop.permute.xlu0 %700
        %vm702 = vcmp.lt.s32.totalorder %v261, 111
        %v703 = vsel %vm702, %v699, %v701
        %v704 = vsel %vm702, %v701, %v699
        %s705 = scalar_lea.vmem %s0, 512
        %v706 = vld [vmem:[%s705] sm:$0xff]
        %v707 = vld [vmem:[%s705 + $0x8] sm:$0xff]
        %v708 = vmul.f32 %v703, %v706
        %v709 = vmul.f32 %v704, %v707
        %v710 = vadd.f32 %v696, %v708
        %v711 = vadd.f32 %v697, %v709
        %712 = vrot.lane.b32.xlu0 %v253, 110
        %v713 = vpop.permute.xlu0 %712
        %714 = vrot.lane.b32.xlu0 %v254, 110
        %v715 = vpop.permute.xlu0 %714
        %vm716 = vcmp.lt.s32.totalorder %v261, 110
        %v717 = vsel %vm716, %v713, %v715
        %v718 = vsel %vm716, %v715, %v713
        %s719 = scalar_lea.vmem %s0, 528
        %v720 = vld [vmem:[%s719] sm:$0xff]
        %v721 = vld [vmem:[%s719 + $0x8] sm:$0xff]
        %v722 = vmul.f32 %v717, %v720
        %v723 = vmul.f32 %v718, %v721
        %v724 = vadd.f32 %v710, %v722
        %v725 = vadd.f32 %v711, %v723
        %726 = vrot.lane.b32.xlu0 %v253, 109
        %v727 = vpop.permute.xlu0 %726
        %728 = vrot.lane.b32.xlu0 %v254, 109
        %v729 = vpop.permute.xlu0 %728
        %vm730 = vcmp.lt.s32.totalorder %v261, 109
        %v731 = vsel %vm730, %v727, %v729
        %v732 = vsel %vm730, %v729, %v727
        %s733 = scalar_lea.vmem %s0, 544
        %v734 = vld [vmem:[%s733] sm:$0xff]
        %v735 = vld [vmem:[%s733 + $0x8] sm:$0xff]
        %v736 = vmul.f32 %v731, %v734
        %v737 = vmul.f32 %v732, %v735
        %v738 = vadd.f32 %v724, %v736
        %v739 = vadd.f32 %v725, %v737
        %740 = vrot.lane.b32.xlu0 %v253, 99
        %v741 = vpop.permute.xlu0 %740
        %742 = vrot.lane.b32.xlu0 %v254, 99
        %v743 = vpop.permute.xlu0 %742
        %vm744 = vcmp.lt.s32.totalorder %v261, 99
        %v745 = vsel %vm744, %v741, %v743
        %v746 = vsel %vm744, %v743, %v741
        %s747 = scalar_lea.vmem %s0, 560
        %v748 = vld [vmem:[%s747] sm:$0xff]
        %v749 = vld [vmem:[%s747 + $0x8] sm:$0xff]
        %v750 = vmul.f32 %v745, %v748
        %v751 = vmul.f32 %v746, %v749
        %v752 = vadd.f32 %v738, %v750
        %v753 = vadd.f32 %v739, %v751
        %754 = vrot.lane.b32.xlu0 %v253, 98
        %v755 = vpop.permute.xlu0 %754
        %756 = vrot.lane.b32.xlu0 %v254, 98
        %v757 = vpop.permute.xlu0 %756
        %vm758 = vcmp.lt.s32.totalorder %v261, 98
        %v759 = vsel %vm758, %v755, %v757
        %v760 = vsel %vm758, %v757, %v755
        %s761 = scalar_lea.vmem %s0, 576
        %v762 = vld [vmem:[%s761] sm:$0xff]
        %v763 = vld [vmem:[%s761 + $0x8] sm:$0xff]
        %v764 = vmul.f32 %v759, %v762
        %v765 = vmul.f32 %v760, %v763
        %v766 = vadd.f32 %v752, %v764
        %v767 = vadd.f32 %v753, %v765
        %768 = vrot.lane.b32.xlu0 %v253, 97
        %v769 = vpop.permute.xlu0 %768
        %770 = vrot.lane.b32.xlu0 %v254, 97
        %v771 = vpop.permute.xlu0 %770
        %vm772 = vcmp.lt.s32.totalorder %v261, 97
        %v773 = vsel %vm772, %v769, %v771
        %v774 = vsel %vm772, %v771, %v769
        %s775 = scalar_lea.vmem %s0, 592
        %v776 = vld [vmem:[%s775] sm:$0xff]
        %v777 = vld [vmem:[%s775 + $0x8] sm:$0xff]
        %v778 = vmul.f32 %v773, %v776
        %v779 = vmul.f32 %v774, %v777
        %v780 = vadd.f32 %v766, %v778
        %v781 = vadd.f32 %v767, %v779
        %782 = vrot.lane.b32.xlu0 %v253, 96
        %v783 = vpop.permute.xlu0 %782
        %784 = vrot.lane.b32.xlu0 %v254, 96
        %v785 = vpop.permute.xlu0 %784
        %vm786 = vcmp.lt.s32.totalorder %v261, 96
        %v787 = vsel %vm786, %v783, %v785
        %v788 = vsel %vm786, %v785, %v783
        %s789 = scalar_lea.vmem %s0, 608
        %v790 = vld [vmem:[%s789] sm:$0xff]
        %v791 = vld [vmem:[%s789 + $0x8] sm:$0xff]
        %v792 = vmul.f32 %v787, %v790
        %v793 = vmul.f32 %v788, %v791
        %v794 = vadd.f32 %v780, %v792
        %v795 = vadd.f32 %v781, %v793
        %796 = vrot.lane.b32.xlu0 %v253, 95
        %v797 = vpop.permute.xlu0 %796
        %798 = vrot.lane.b32.xlu0 %v254, 95
        %v799 = vpop.permute.xlu0 %798
        %vm800 = vcmp.lt.s32.totalorder %v261, 95
        %v801 = vsel %vm800, %v797, %v799
        %v802 = vsel %vm800, %v799, %v797
        %s803 = scalar_lea.vmem %s0, 624
        %v804 = vld [vmem:[%s803] sm:$0xff]
        %v805 = vld [vmem:[%s803 + $0x8] sm:$0xff]
        %v806 = vmul.f32 %v801, %v804
        %v807 = vmul.f32 %v802, %v805
        %v808 = vadd.f32 %v794, %v806
        %v809 = vadd.f32 %v795, %v807
        %810 = vrot.lane.b32.xlu0 %v253, 94
        %v811 = vpop.permute.xlu0 %810
        %812 = vrot.lane.b32.xlu0 %v254, 94
        %v813 = vpop.permute.xlu0 %812
        %vm814 = vcmp.lt.s32.totalorder %v261, 94
        %v815 = vsel %vm814, %v811, %v813
        %v816 = vsel %vm814, %v813, %v811
        %s817 = scalar_lea.vmem %s0, 640
        %v818 = vld [vmem:[%s817] sm:$0xff]
        %v819 = vld [vmem:[%s817 + $0x8] sm:$0xff]
        %v820 = vmul.f32 %v815, %v818
        %v821 = vmul.f32 %v816, %v819
        %v822 = vadd.f32 %v808, %v820
        %v823 = vadd.f32 %v809, %v821
        %824 = vrot.lane.b32.xlu0 %v253, 93
        %v825 = vpop.permute.xlu0 %824
        %826 = vrot.lane.b32.xlu0 %v254, 93
        %v827 = vpop.permute.xlu0 %826
        %vm828 = vcmp.lt.s32.totalorder %v261, 93
        %v829 = vsel %vm828, %v825, %v827
        %v830 = vsel %vm828, %v827, %v825
        %s831 = scalar_lea.vmem %s0, 656
        %v832 = vld [vmem:[%s831] sm:$0xff]
        %v833 = vld [vmem:[%s831 + $0x8] sm:$0xff]
        %v834 = vmul.f32 %v829, %v832
        %v835 = vmul.f32 %v830, %v833
        %v836 = vadd.f32 %v822, %v834
        %v837 = vadd.f32 %v823, %v835
        %838 = vrot.lane.b32.xlu0 %v253, 83
        %v839 = vpop.permute.xlu0 %838
        %840 = vrot.lane.b32.xlu0 %v254, 83
        %v841 = vpop.permute.xlu0 %840
        %vm842 = vcmp.lt.s32.totalorder %v261, 83
        %v843 = vsel %vm842, %v839, %v841
        %v844 = vsel %vm842, %v841, %v839
        %s845 = scalar_lea.vmem %s0, 672
        %v846 = vld [vmem:[%s845] sm:$0xff]
        %v847 = vld [vmem:[%s845 + $0x8] sm:$0xff]
        %v848 = vmul.f32 %v843, %v846
        %v849 = vmul.f32 %v844, %v847
        %v850 = vadd.f32 %v836, %v848
        %v851 = vadd.f32 %v837, %v849
        %852 = vrot.lane.b32.xlu0 %v253, 82
        %v853 = vpop.permute.xlu0 %852
        %854 = vrot.lane.b32.xlu0 %v254, 82
        %v855 = vpop.permute.xlu0 %854
        %vm856 = vcmp.lt.s32.totalorder %v261, 82
        %v857 = vsel %vm856, %v853, %v855
        %v858 = vsel %vm856, %v855, %v853
        %s859 = scalar_lea.vmem %s0, 688
        %v860 = vld [vmem:[%s859] sm:$0xff]
        %v861 = vld [vmem:[%s859 + $0x8] sm:$0xff]
        %v862 = vmul.f32 %v857, %v860
        %v863 = vmul.f32 %v858, %v861
        %v864 = vadd.f32 %v850, %v862
        %v865 = vadd.f32 %v851, %v863
        %866 = vrot.lane.b32.xlu0 %v253, 81
        %v867 = vpop.permute.xlu0 %866
        %868 = vrot.lane.b32.xlu0 %v254, 81
        %v869 = vpop.permute.xlu0 %868
        %vm870 = vcmp.lt.s32.totalorder %v261, 81
        %v871 = vsel %vm870, %v867, %v869
        %v872 = vsel %vm870, %v869, %v867
        %s873 = scalar_lea.vmem %s0, 704
        %v874 = vld [vmem:[%s873] sm:$0xff]
        %v875 = vld [vmem:[%s873 + $0x8] sm:$0xff]
        %v876 = vmul.f32 %v871, %v874
        %v877 = vmul.f32 %v872, %v875
        %v878 = vadd.f32 %v864, %v876
        %v879 = vadd.f32 %v865, %v877
        %880 = vrot.lane.b32.xlu0 %v253, 80
        %v881 = vpop.permute.xlu0 %880
        %882 = vrot.lane.b32.xlu0 %v254, 80
        %v883 = vpop.permute.xlu0 %882
        %vm884 = vcmp.lt.s32.totalorder %v261, 80
        %v885 = vsel %vm884, %v881, %v883
        %v886 = vsel %vm884, %v883, %v881
        %s887 = scalar_lea.vmem %s0, 720
        %v888 = vld [vmem:[%s887] sm:$0xff]
        %v889 = vld [vmem:[%s887 + $0x8] sm:$0xff]
        %v890 = vmul.f32 %v885, %v888
        %v891 = vmul.f32 %v886, %v889
        %v892 = vadd.f32 %v878, %v890
        %v893 = vadd.f32 %v879, %v891
        %894 = vrot.lane.b32.xlu0 %v253, 79
        %v895 = vpop.permute.xlu0 %894
        %896 = vrot.lane.b32.xlu0 %v254, 79
        %v897 = vpop.permute.xlu0 %896
        %vm898 = vcmp.lt.s32.totalorder %v261, 79
        %v899 = vsel %vm898, %v895, %v897
        %v900 = vsel %vm898, %v897, %v895
        %s901 = scalar_lea.vmem %s0, 736
        %v902 = vld [vmem:[%s901] sm:$0xff]
        %v903 = vld [vmem:[%s901 + $0x8] sm:$0xff]
        %v904 = vmul.f32 %v899, %v902
        %v905 = vmul.f32 %v900, %v903
        %v906 = vadd.f32 %v892, %v904
        %v907 = vadd.f32 %v893, %v905
        %908 = vrot.lane.b32.xlu0 %v253, 78
        %v909 = vpop.permute.xlu0 %908
        %910 = vrot.lane.b32.xlu0 %v254, 78
        %v911 = vpop.permute.xlu0 %910
        %vm912 = vcmp.lt.s32.totalorder %v261, 78
        %v913 = vsel %vm912, %v909, %v911
        %v914 = vsel %vm912, %v911, %v909
        %s915 = scalar_lea.vmem %s0, 752
        %v916 = vld [vmem:[%s915] sm:$0xff]
        %v917 = vld [vmem:[%s915 + $0x8] sm:$0xff]
        %v918 = vmul.f32 %v913, %v916
        %v919 = vmul.f32 %v914, %v917
        %v920 = vadd.f32 %v906, %v918
        %v921 = vadd.f32 %v907, %v919
        %922 = vrot.lane.b32.xlu0 %v253, 77
        %v923 = vpop.permute.xlu0 %922
        %924 = vrot.lane.b32.xlu0 %v254, 77
        %v925 = vpop.permute.xlu0 %924
        %vm926 = vcmp.lt.s32.totalorder %v261, 77
        %v927 = vsel %vm926, %v923, %v925
        %v928 = vsel %vm926, %v925, %v923
        %s929 = scalar_lea.vmem %s0, 768
        %v930 = vld [vmem:[%s929] sm:$0xff]
        %v931 = vld [vmem:[%s929 + $0x8] sm:$0xff]
        %v932 = vmul.f32 %v927, %v930
        %v933 = vmul.f32 %v928, %v931
        %v934 = vadd.f32 %v920, %v932
        %v935 = vadd.f32 %v921, %v933
        %937 = vset.pattern.permute.xlu0 0
        %938 = vperm.xlu0 %937, %v255
        %v939 = vpop.permute.xlu0 %938
        %v941 = vadd.f32 %v934, %v939
        %v942 = vadd.f32 %v935, %v939
        %s943 = smul.u32 %s21, 2
        %s944 = smul.addr %s943, 8
        %s945 = scalar_lea.vmem [#allocation2], %s944
        %946 = vst [vmem:[%s945] sm:$0xff] %v941
        %947 = vst [vmem:[%s945 + $0x8] sm:$0xff] %v942
        %v948 = vld [vmem:[#allocation3] sm:$0xff]
        %v949 = vadd.f32 %v941, %v942
        %950 = vadd.xlane.f32.xlu0 %v949
        %v951 = vpop.xlane.xlu0 %950
        %v952 = vadd.f32 %v948, %v951
        %vm953 = vcmask 7168
        %954 = vst.msk [vmem:[#allocation3] sm:$0xff] %vm953, %v952
        %v955 = vld [vmem:[#allocation4] sm:$0xff]
        %v956 = vmul.f32 %v941, %v941
        %v957 = vmul.f32 %v942, %v942
        %v958 = vadd.f32 %v956, %v957
        %959 = vadd.xlane.f32.xlu0 %v958
        %v960 = vpop.xlane.xlu0 %959
        %v961 = vadd.f32 %v955, %v960
        %962 = vst.msk [vmem:[#allocation4] sm:$0xff] %vm953, %v961
      $region44: #{global_mixer.1} parent=39 // pred_fallthru
        _
      %p963 = scmp.eq.s32.totalorder %s20, 1
      // Predicated region
      $region49: #{global_mixer.1} parent=39 // pred_check
        %p964 = pneg %p963
      $region50: #{global_mixer.1} parent=39 // pred_check_branch
        %966 = sbr.rel (%p964) target = $region52
      $region51: #{global_mixer.1} parent=39 // pred_region
        %v967 = vld [vmem:[#allocation3] sm:$0xff]
        %v968 = vmul.f32 %v967, 0.001953125
        %v969 = vld [vmem:[#allocation4] sm:$0xff]
        %v970 = vmul.f32 %v969, 0.001953125
        %v971 = vmul.f32 %v968, %v968
        %v972 = vsub.f32 %v970, %v971
        %v973 = vmax.f32 %v972, 0.0
        %v974 = vld [vmem:[%s2] sm:$0xff]
        %v975 = vadd.f32 %v973, 1e-05
        %v976 = vrsqrt.pop %v975
        %v977 = vmul.f32 %v974, %v976
        %v978 = vld [vmem:[%s3] sm:$0xff]
        %v979 = vmul.f32 %v968, %v977
        %v980 = vsub.f32 %v978, %v979
        %s981 = smul.u32 %s21, 2
        %s982 = smul.addr %s981, 8
        %s983 = scalar_lea.vmem [#allocation2], %s982
        %v984 = vld [vmem:[%s983] sm:$0xff]
        %v985 = vld [vmem:[%s983 + $0x8] sm:$0xff]
        %987 = vset.pattern.permute.xlu0 0
        %988 = vperm.xlu0 %987, %v977
        %v989 = vpop.permute.xlu0 %988
        %v991 = vmul.f32 %v984, %v989
        %v992 = vmul.f32 %v985, %v989
        %994 = vset.pattern.permute.xlu0 0
        %995 = vperm.xlu0 %994, %v980
        %v996 = vpop.permute.xlu0 %995
        %v998 = vadd.f32 %v991, %v996
        %v999 = vadd.f32 %v992, %v996
        %v1000 = vmax.f32 %v998, 0.0
        %v1001 = vmax.f32 %v999, 0.0
        %v1002 = vld [vmem:[%s234] sm:$0xff]
        %v1003 = vld [vmem:[%s234 + $0x8] sm:$0xff]
        %v1004 = vadd.f32 %v1000, %v1002
        %v1005 = vadd.f32 %v1001, %v1003
        %1006 = vst [vmem:[%s240] sm:$0xff] %v1004
        %1007 = vst [vmem:[%s240 + $0x8] sm:$0xff] %v1005
      $region52: #{global_mixer.1} parent=39 // pred_fallthru
        _
      %s1008 = smul.u32 %s20, %s21
      %p1009 = scmp.lt.s32.totalorder %s1008, 1
      %s1010 = scalar_select %p1009, %s1008, 1
      %s1011 = smul.addr %s1010, 2
      %s1012 = smul.addr %s1011, 8
      %s1013 = scalar_lea.vmem %s5, %s1012
      // Predicated region
      $region53: #{global_mixer.1} parent=39 // pred_check
        %p1014 = pneg %p158
      $region54: #{global_mixer.1} parent=39 // pred_check_branch
        %1016 = sbr.rel (%p1014) target = $region56
      $region55: #{global_mixer.1} parent=39 // pred_region
        %s1017 = smul.u32 %s20, %s21
      $region56: #{global_mixer.1} parent=39 // pred_fallthru
        _
    $region40: #{global_mixer.1} parent=5 // pred_fallthru
      _
    %p1018 = scmp.le.s32.totalorder 2, %s11
    // Predicated region
    $region57: #{global_mixer.1} parent=5 // pred_check
      %p1019 = pneg %p1018
    $region58: #{global_mixer.1} parent=5 // pred_check_branch
      %1021 = sbr.rel (%p1019) target = $region60
    $region59: #{global_mixer.1} parent=5 // pred_region
      %s1022 = ssub.s32 %s11, 2
      // Predicated region
      $region61: #{global_mixer.1} parent=59 // pred_check
        %p1023 = pneg %p164
      $region62: #{global_mixer.1} parent=59 // pred_check_branch
        %1025 = sbr.rel (%p1023) target = $region64
      $region63: #{global_mixer.1} parent=59 // pred_region
        %s1026 = smul.u32 %s22, %s23
        %p1027 = scmp.lt.s32.totalorder %s1026, 1
        %s1028 = scalar_select %p1027, %s1026, 1
        %s1029 = smul.addr %s1028, 2
        %s1030 = smul.addr %s1029, 8
        %s1031 = scalar_lea.vmem %s5, %s1030
      $region64: #{global_mixer.1} parent=59 // pred_fallthru
        _
    $region60: #{global_mixer.1} parent=5 // pred_fallthru
      _
  $region6: #{global_mixer.1} parent=0 // loop_footer
    %s15 = sadd.s32 1, %s11
  $region7: #{global_mixer.1} parent=0 // loop_footer_branch
    %10 = sbr.rel target = $region3
  $region8: #{global_mixer.1} parent=0 // loop_exit
    _

</llo_original>
